<compile_context>
chip_gen: v6e
topology: v6e:2x2x1
jax: 0.10.0
libtpu: 0.0.40
codegen_flags: <defaults>
</compile_context>

<pallas_src>
import functools

import jax
import jax.numpy as jnp
import numpy as np
from jax import lax
from jax.experimental import pallas as pl
from jax.experimental.pallas import tpu as pltpu

LN_EPS = 1e-5                     # torch.nn.LayerNorm default
_INV_SQRT2 = 0.7071067811865476


# ---------------- in-kernel math ----------------

def _gelu(x, approximate=False):
    if approximate:
        # tanh form runs on the EUP slot (free on v6e/v7x) but deviates ~1e-3 from
        # torch's default erf GELU; keep exact erf by default for semantics parity.
        return jax.nn.gelu(x, approximate=True)
    return 0.5 * x * (1.0 + lax.erf(x * jnp.float32(_INV_SQRT2)))


def _layer_norm_over_h(x, gamma, beta):
    # x: (C, H, W) -- normalize over H (the n_feats axis), per (c, w).
    # gamma, beta: (H, 1) VMEM tiles (broadcast along lanes/W).
    mean = jnp.mean(x, axis=1, keepdims=True)
    var = jnp.mean(jnp.square(x - mean), axis=1, keepdims=True)
    xn = (x - mean) * lax.rsqrt(var + LN_EPS)
    return xn * gamma[None, :, :] + beta[None, :, :]


def _conv_same_mxu(h_mat, B_ref, masks, *, K, pad):
    # h_mat: (CH, W) activation; B_ref: (K, CH, CH) banded weights; masks[dw]: (CH, W).
    # One matmul per time tap kw; kw shift = lane roll + edge mask (zero "same" pad).
    CH, W = h_mat.shape
    acc = None
    for t in range(K):
        dw = t - pad
        xs = h_mat
        if dw != 0:
            xs = pltpu.roll(h_mat, shift=(-dw) % W, axis=1)        # lane rotate (XLU)
            xs = jnp.where(masks[dw], xs, jnp.float32(0.0))        # zero wrapped frames
        y = jnp.dot(B_ref[t], xs, preferred_element_type=jnp.float32)   # MXU
        acc = y if acc is None else acc + y
    return acc


def _residual_cnn_kernel(x_ref, g1_ref, be1_ref, B1_ref, b1_ref,
                         g2_ref, be2_ref, B2_ref, b2_ref, o_ref,
                         *, K, pad, approximate_gelu):
    x0 = x_ref[0].astype(jnp.float32)            # (C, H, W) residual input
    C, H, W = x0.shape
    CH = C * H

    # Lane-edge masks for the time-tap shifts, hoisted: shared by both convs.
    w_idx = lax.broadcasted_iota(jnp.int32, (CH, W), 1)
    masks = {}
    for dw in range(-pad, pad + 1):
        if dw > 0:
            masks[dw] = w_idx < (W - dw)
        elif dw < 0:
            masks[dw] = w_idx >= (-dw)

    h = _layer_norm_over_h(x0, g1_ref[...], be1_ref[...])
    h = _gelu(h, approximate_gelu)
    # dropout1: identity (eval)
    h = _conv_same_mxu(h.reshape(CH, W), B1_ref, masks, K=K, pad=pad) + b1_ref[...]

    h = _layer_norm_over_h(h.reshape(C, H, W), g2_ref[...], be2_ref[...])
    h = _gelu(h, approximate_gelu)
    # dropout2: identity (eval)
    out = _conv_same_mxu(h.reshape(CH, W), B2_ref, masks, K=K, pad=pad)
    # conv2 bias + residual folded into the single output store (no extra live stack)
    out = out + b2_ref[...] + x0.reshape(CH, W)
    o_ref[0] = out.reshape(C, H, W).astype(o_ref.dtype)


# ---------------- wrapper ----------------

def _build_banded(wgt, H, pad):
    """Fold OIHW conv weights into K block-banded (C*H, C*H) matrices, one per time tap.

    B[t][co*H + h_out, ci*H + h_in] = wgt[co, ci, h_in - h_out + pad, t]
    when 0 <= h_in - h_out + pad < K, else 0 ("same" zero padding over n_feats).
    """
    C = wgt.shape[0]
    K = wgt.shape[2]
    h_out = jnp.arange(H)[:, None]                  # (H, 1)
    h_in = jnp.arange(H)[None, :]                   # (1, H)
    kh = h_in - h_out + pad                         # (H, H)
    valid = ((kh >= 0) & (kh < K)).astype(wgt.dtype)
    kh_c = jnp.clip(kh, 0, K - 1)
    mats = []
    for t in range(K):
        blocks = wgt[:, :, :, t][:, :, kh_c] * valid            # (C, C, H, H)
        mats.append(jnp.transpose(blocks, (0, 2, 1, 3)).reshape(C * H, C * H))
    return jnp.stack(mats, axis=0)                              # (K, CH, CH)


def residual_cnn_forward(x_nchw, params, *, kernel=3, approximate_gelu=False):
    """x_nchw: (N, C, n_feats, W) float32, PyTorch NCHW layout (kept native)."""
    pad = kernel // 2
    N, C, H, W = x_nchw.shape
    CH = C * H
    f32 = jnp.float32

    g1 = params["ln1_gamma"].reshape(H, 1).astype(f32)
    be1 = params["ln1_beta"].reshape(H, 1).astype(f32)
    g2 = params["ln2_gamma"].reshape(H, 1).astype(f32)
    be2 = params["ln2_beta"].reshape(H, 1).astype(f32)
    B1 = _build_banded(params["conv1_w"].astype(f32), H, pad)   # (K, CH, CH)
    B2 = _build_banded(params["conv2_w"].astype(f32), H, pad)
    b1 = jnp.repeat(params["conv1_b"].astype(f32), H).reshape(CH, 1)
    b2 = jnp.repeat(params["conv2_b"].astype(f32), H).reshape(CH, 1)

    x_spec = pl.BlockSpec((1, C, H, W), lambda n: (n, 0, 0, 0))
    vec_spec = pl.BlockSpec((H, 1), lambda n: (0, 0))
    mat_spec = pl.BlockSpec((kernel, CH, CH), lambda n: (0, 0, 0))
    col_spec = pl.BlockSpec((CH, 1), lambda n: (0, 0))

    # Scheduler hints: banded matmuls dominate flops; 2 GELUs (+ rsqrt) of transcendentals.
    flops = 2 * kernel * 2 * CH * CH * W * N + 30 * N * C * H * W
    transcendentals = 2 * N * C * H * W + 2 * N * C * W
    bytes_accessed = 2 * N * C * H * W * 4 + (2 * kernel * CH * CH + 2 * CH + 4 * H) * 4

    out = pl.pallas_call(
        functools.partial(_residual_cnn_kernel, K=kernel, pad=pad,
                          approximate_gelu=approximate_gelu),
        out_shape=jax.ShapeDtypeStruct((N, C, H, W), x_nchw.dtype),
        grid=(N,),
        in_specs=[x_spec,
                  vec_spec, vec_spec, mat_spec, col_spec,
                  vec_spec, vec_spec, mat_spec, col_spec],
        out_specs=x_spec,
        compiler_params=pltpu.CompilerParams(
            dimension_semantics=("parallel",),
            vmem_limit_bytes=32 * 1024 * 1024),
        cost_estimate=pl.CostEstimate(
            flops=flops, transcendentals=transcendentals,
            bytes_accessed=bytes_accessed),
    )(x_nchw, g1, be1, B1, b1, g2, be2, B2, b2)
    return out


# ---------------- pure-JAX reference (for verification) ----------------

def _ref_layernorm_cnn(x, gamma, beta):
    # x: NCHW, normalize over H (n_feats) per (n, c, w)
    xt = jnp.transpose(x, (0, 1, 3, 2))
    mean = xt.mean(-1, keepdims=True)
    var = ((xt - mean) ** 2).mean(-1, keepdims=True)
    xn = (xt - mean) / jnp.sqrt(var + LN_EPS) * gamma + beta
    return jnp.transpose(xn, (0, 1, 3, 2))


def _ref_conv(x, w, b, pad):
    y = lax.conv_general_dilated(
        x, w, window_strides=(1, 1), padding=[(pad, pad), (pad, pad)],
        dimension_numbers=("NCHW", "OIHW", "NCHW"))
    return y + b[None, :, None, None]


def residual_cnn_reference(x, params, *, kernel=3):
    pad = kernel // 2
    residual = x
    h = _ref_layernorm_cnn(x, params["ln1_gamma"], params["ln1_beta"])
    h = 0.5 * h * (1.0 + lax.erf(h / jnp.sqrt(2.0)))
    h = _ref_conv(h, params["conv1_w"], params["conv1_b"], pad)
    h = _ref_layernorm_cnn(h, params["ln2_gamma"], params["ln2_beta"])
    h = 0.5 * h * (1.0 + lax.erf(h / jnp.sqrt(2.0)))
    h = _ref_conv(h, params["conv2_w"], params["conv2_b"], pad)
    return h + residual


# ---------------- main ----------------

if __name__ == "__main__":
    # ResidualCNN(in_channels=4, out_channels=4, kernel=3, stride=1, dropout=0.1, n_feats=16)
    N, C, n_feats, T = 2, 4, 16, 16
    K = 3

    key = jax.random.PRNGKey(0)
    ks = jax.random.split(key, 9)
    params = {
        "ln1_gamma": 1.0 + 0.1 * jax.random.normal(ks[0], (n_feats,), jnp.float32),
        "ln1_beta":  0.1 * jax.random.normal(ks[1], (n_feats,), jnp.float32),
        "ln2_gamma": 1.0 + 0.1 * jax.random.normal(ks[2], (n_feats,), jnp.float32),
        "ln2_beta":  0.1 * jax.random.normal(ks[3], (n_feats,), jnp.float32),
        "conv1_w": 0.1 * jax.random.normal(ks[4], (C, C, K, K), jnp.float32),
        "conv1_b": 0.1 * jax.random.normal(ks[5], (C,), jnp.float32),
        "conv2_w": 0.1 * jax.random.normal(ks[6], (C, C, K, K), jnp.float32),
        "conv2_b": 0.1 * jax.random.normal(ks[7], (C,), jnp.float32),
    }
    x = jax.random.normal(ks[8], (N, C, n_feats, T), jnp.float32)

    out = jax.block_until_ready(residual_cnn_forward(x, params, kernel=K))
    ref = jax.block_until_ready(residual_cnn_reference(x, params, kernel=K))

    assert out.shape == (N, C, n_feats, T), out.shape
    np.testing.assert_allclose(np.asarray(out), np.asarray(ref), atol=1e-4, rtol=1e-4)
    print("KERNEL_OK")
</pallas_src>

<mosaic_0001>
module attributes {stable_mosaic.version = 11 : i64} {
  func.func @_residual_cnn_kernel(%arg0: i32, %arg1: memref<1x4x16x16xf32, #tpu.memory_space<vmem>>, %arg2: memref<16x1xf32, #tpu.memory_space<vmem>>, %arg3: memref<16x1xf32, #tpu.memory_space<vmem>>, %arg4: memref<3x64x64xf32, #tpu.memory_space<vmem>>, %arg5: memref<64x1xf32, #tpu.memory_space<vmem>>, %arg6: memref<16x1xf32, #tpu.memory_space<vmem>>, %arg7: memref<16x1xf32, #tpu.memory_space<vmem>>, %arg8: memref<3x64x64xf32, #tpu.memory_space<vmem>>, %arg9: memref<64x1xf32, #tpu.memory_space<vmem>>, %arg10: memref<1x4x16x16xf32, #tpu.memory_space<vmem>>) attributes {dimension_semantics = [#tpu.dimension_semantics<parallel>], iteration_bounds = array<i64: 2>, scalar_prefetch = 0 : i64, scratch_operands = 0 : i64, tpu.core_type = #tpu.core_type<tc>, window_params = [{transform_indices = @transform_0, window_bounds = array<i64: 1, 4, 16, 16>}, {pipeline_mode = #tpu.pipeline_mode<synchronous>, transform_indices = @transform_1, window_bounds = array<i64: 16, 1>}, {pipeline_mode = #tpu.pipeline_mode<synchronous>, transform_indices = @transform_2, window_bounds = array<i64: 16, 1>}, {pipeline_mode = #tpu.pipeline_mode<synchronous>, transform_indices = @transform_3, window_bounds = array<i64: 3, 64, 64>}, {pipeline_mode = #tpu.pipeline_mode<synchronous>, transform_indices = @transform_4, window_bounds = array<i64: 64, 1>}, {pipeline_mode = #tpu.pipeline_mode<synchronous>, transform_indices = @transform_5, window_bounds = array<i64: 16, 1>}, {pipeline_mode = #tpu.pipeline_mode<synchronous>, transform_indices = @transform_6, window_bounds = array<i64: 16, 1>}, {pipeline_mode = #tpu.pipeline_mode<synchronous>, transform_indices = @transform_7, window_bounds = array<i64: 3, 64, 64>}, {pipeline_mode = #tpu.pipeline_mode<synchronous>, transform_indices = @transform_8, window_bounds = array<i64: 64, 1>}, {transform_indices = @transform_9, window_bounds = array<i64: 1, 4, 16, 16>}]} {
    %c0 = arith.constant 0 : index
    %c0_0 = arith.constant 0 : index
    %c0_1 = arith.constant 0 : index
    %c0_2 = arith.constant 0 : index
    %0 = vector.load %arg1[%c0, %c0_0, %c0_1, %c0_2] : memref<1x4x16x16xf32, #tpu.memory_space<vmem>>, vector<1x4x16x16xf32>
    %1 = vector.shape_cast %0 : vector<1x4x16x16xf32> to vector<4x16x16xf32>
    %2 = tpu.iota {dimensions = array<i32: 1>} : vector<64x16xi32>
    %c1_i32 = arith.constant 1 : i32
    %3 = vector.broadcast %c1_i32 : i32 to vector<64x16xi32>
    %4 = arith.cmpi sge, %2, %3 : vector<64x16xi32>
    %c15_i32 = arith.constant 15 : i32
    %5 = vector.broadcast %c15_i32 : i32 to vector<64x16xi32>
    %6 = arith.cmpi slt, %2, %5 : vector<64x16xi32>
    %c0_3 = arith.constant 0 : index
    %c0_4 = arith.constant 0 : index
    %7 = vector.load %arg2[%c0_3, %c0_4] : memref<16x1xf32, #tpu.memory_space<vmem>>, vector<16x1xf32>
    %c0_5 = arith.constant 0 : index
    %c0_6 = arith.constant 0 : index
    %8 = vector.load %arg3[%c0_5, %c0_6] : memref<16x1xf32, #tpu.memory_space<vmem>>, vector<16x1xf32>
    %cst = arith.constant dense<0.000000e+00> : vector<4x16xf32>
    %9 = vector.multi_reduction <add>, %1, %cst [1] : vector<4x16x16xf32> to vector<4x16xf32>
    %10 = vector.shape_cast %9 : vector<4x16xf32> to vector<4x1x16xf32>
    %cst_7 = arith.constant 1.600000e+01 : f32
    %11 = vector.broadcast %cst_7 : f32 to vector<4x1x16xf32>
    %12 = arith.divf %10, %11 : vector<4x1x16xf32>
    %13 = vector.broadcast %12 : vector<4x1x16xf32> to vector<4x16x16xf32>
    %14 = arith.subf %1, %13 : vector<4x16x16xf32>
    %15 = arith.mulf %14, %14 : vector<4x16x16xf32>
    %cst_8 = arith.constant dense<0.000000e+00> : vector<4x16xf32>
    %16 = vector.multi_reduction <add>, %15, %cst_8 [1] : vector<4x16x16xf32> to vector<4x16xf32>
    %17 = vector.shape_cast %16 : vector<4x16xf32> to vector<4x1x16xf32>
    %cst_9 = arith.constant 1.600000e+01 : f32
    %18 = vector.broadcast %cst_9 : f32 to vector<4x1x16xf32>
    %19 = arith.divf %17, %18 : vector<4x1x16xf32>
    %20 = vector.broadcast %12 : vector<4x1x16xf32> to vector<4x16x16xf32>
    %21 = arith.subf %1, %20 : vector<4x16x16xf32>
    %cst_10 = arith.constant 9.99999974E-6 : f32
    %22 = vector.broadcast %cst_10 : f32 to vector<4x1x16xf32>
    %23 = arith.addf %19, %22 : vector<4x1x16xf32>
    %24 = math.rsqrt %23 : vector<4x1x16xf32>
    %25 = vector.broadcast %24 : vector<4x1x16xf32> to vector<4x16x16xf32>
    %26 = arith.mulf %21, %25 : vector<4x16x16xf32>
    %27 = vector.shape_cast %7 : vector<16x1xf32> to vector<1x16x1xf32>
    %28 = vector.broadcast %27 : vector<1x16x1xf32> to vector<4x16x16xf32>
    %29 = arith.mulf %26, %28 : vector<4x16x16xf32>
    %30 = vector.shape_cast %8 : vector<16x1xf32> to vector<1x16x1xf32>
    %31 = vector.broadcast %30 : vector<1x16x1xf32> to vector<4x16x16xf32>
    %32 = arith.addf %29, %31 : vector<4x16x16xf32>
    %cst_11 = arith.constant 5.000000e-01 : f32
    %33 = vector.broadcast %cst_11 : f32 to vector<4x16x16xf32>
    %34 = arith.mulf %33, %32 : vector<4x16x16xf32>
    %cst_12 = arith.constant 0.707106769 : f32
    %35 = vector.broadcast %cst_12 : f32 to vector<4x16x16xf32>
    %36 = arith.mulf %32, %35 : vector<4x16x16xf32>
    %37 = math.erf %36 : vector<4x16x16xf32>
    %cst_13 = arith.constant 1.000000e+00 : f32
    %38 = vector.broadcast %cst_13 : f32 to vector<4x16x16xf32>
    %39 = arith.addf %38, %37 : vector<4x16x16xf32>
    %40 = arith.mulf %34, %39 : vector<4x16x16xf32>
    %41 = vector.shape_cast %40 : vector<4x16x16xf32> to vector<64x16xf32>
    %c1_i32_14 = arith.constant 1 : i32
    %42 = tpu.dynamic_rotate %41 by %c1_i32_14 dim 1 : vector<64x16xf32>, i32 -> vector<64x16xf32>
    %cst_15 = arith.constant 0.000000e+00 : f32
    %43 = vector.broadcast %cst_15 : f32 to vector<64x16xf32>
    %44 = arith.select %4, %42, %43 : vector<64x16xi1>, vector<64x16xf32>
    %c0_16 = arith.constant 0 : index
    %c0_17 = arith.constant 0 : index
    %c0_18 = arith.constant 0 : index
    %45 = vector.load %arg4[%c0_16, %c0_17, %c0_18] : memref<3x64x64xf32, #tpu.memory_space<vmem>>, vector<1x64x64xf32>
    %46 = vector.shape_cast %45 : vector<1x64x64xf32> to vector<64x64xf32>
    %cst_19 = arith.constant dense<0.000000e+00> : vector<64x16xf32>
    %47 = tpu.matmul %46, %44, %cst_19 {dimension_numbers = #tpu.dot_dimension_numbers<[1], [0], [0], [1], [0, 0, 1, 1], [], []>} : vector<64x64xf32>, vector<64x16xf32>, vector<64x16xf32> -> vector<64x16xf32>
    %c1 = arith.constant 1 : index
    %c0_20 = arith.constant 0 : index
    %c0_21 = arith.constant 0 : index
    %48 = vector.load %arg4[%c1, %c0_20, %c0_21] : memref<3x64x64xf32, #tpu.memory_space<vmem>>, vector<1x64x64xf32>
    %49 = vector.shape_cast %48 : vector<1x64x64xf32> to vector<64x64xf32>
    %cst_22 = arith.constant dense<0.000000e+00> : vector<64x16xf32>
    %50 = tpu.matmul %49, %41, %cst_22 {dimension_numbers = #tpu.dot_dimension_numbers<[1], [0], [0], [1], [0, 0, 1, 1], [], []>} : vector<64x64xf32>, vector<64x16xf32>, vector<64x16xf32> -> vector<64x16xf32>
    %51 = arith.addf %47, %50 : vector<64x16xf32>
    %c15_i32_23 = arith.constant 15 : i32
    %52 = tpu.dynamic_rotate %41 by %c15_i32_23 dim 1 : vector<64x16xf32>, i32 -> vector<64x16xf32>
    %cst_24 = arith.constant 0.000000e+00 : f32
    %53 = vector.broadcast %cst_24 : f32 to vector<64x16xf32>
    %54 = arith.select %6, %52, %53 : vector<64x16xi1>, vector<64x16xf32>
    %c2 = arith.constant 2 : index
    %c0_25 = arith.constant 0 : index
    %c0_26 = arith.constant 0 : index
    %55 = vector.load %arg4[%c2, %c0_25, %c0_26] : memref<3x64x64xf32, #tpu.memory_space<vmem>>, vector<1x64x64xf32>
    %56 = vector.shape_cast %55 : vector<1x64x64xf32> to vector<64x64xf32>
    %cst_27 = arith.constant dense<0.000000e+00> : vector<64x16xf32>
    %57 = tpu.matmul %56, %54, %cst_27 {dimension_numbers = #tpu.dot_dimension_numbers<[1], [0], [0], [1], [0, 0, 1, 1], [], []>} : vector<64x64xf32>, vector<64x16xf32>, vector<64x16xf32> -> vector<64x16xf32>
    %58 = arith.addf %51, %57 : vector<64x16xf32>
    %c0_28 = arith.constant 0 : index
    %c0_29 = arith.constant 0 : index
    %59 = vector.load %arg5[%c0_28, %c0_29] : memref<64x1xf32, #tpu.memory_space<vmem>>, vector<64x1xf32>
    %60 = vector.broadcast %59 : vector<64x1xf32> to vector<64x16xf32>
    %61 = arith.addf %58, %60 : vector<64x16xf32>
    %62 = vector.shape_cast %61 : vector<64x16xf32> to vector<4x16x16xf32>
    %c0_30 = arith.constant 0 : index
    %c0_31 = arith.constant 0 : index
    %63 = vector.load %arg6[%c0_30, %c0_31] : memref<16x1xf32, #tpu.memory_space<vmem>>, vector<16x1xf32>
    %c0_32 = arith.constant 0 : index
    %c0_33 = arith.constant 0 : index
    %64 = vector.load %arg7[%c0_32, %c0_33] : memref<16x1xf32, #tpu.memory_space<vmem>>, vector<16x1xf32>
    %cst_34 = arith.constant dense<0.000000e+00> : vector<4x16xf32>
    %65 = vector.multi_reduction <add>, %62, %cst_34 [1] : vector<4x16x16xf32> to vector<4x16xf32>
    %66 = vector.shape_cast %65 : vector<4x16xf32> to vector<4x1x16xf32>
    %cst_35 = arith.constant 1.600000e+01 : f32
    %67 = vector.broadcast %cst_35 : f32 to vector<4x1x16xf32>
    %68 = arith.divf %66, %67 : vector<4x1x16xf32>
    %69 = vector.broadcast %68 : vector<4x1x16xf32> to vector<4x16x16xf32>
    %70 = arith.subf %62, %69 : vector<4x16x16xf32>
    %71 = arith.mulf %70, %70 : vector<4x16x16xf32>
    %cst_36 = arith.constant dense<0.000000e+00> : vector<4x16xf32>
    %72 = vector.multi_reduction <add>, %71, %cst_36 [1] : vector<4x16x16xf32> to vector<4x16xf32>
    %73 = vector.shape_cast %72 : vector<4x16xf32> to vector<4x1x16xf32>
    %cst_37 = arith.constant 1.600000e+01 : f32
    %74 = vector.broadcast %cst_37 : f32 to vector<4x1x16xf32>
    %75 = arith.divf %73, %74 : vector<4x1x16xf32>
    %76 = vector.broadcast %68 : vector<4x1x16xf32> to vector<4x16x16xf32>
    %77 = arith.subf %62, %76 : vector<4x16x16xf32>
    %cst_38 = arith.constant 9.99999974E-6 : f32
    %78 = vector.broadcast %cst_38 : f32 to vector<4x1x16xf32>
    %79 = arith.addf %75, %78 : vector<4x1x16xf32>
    %80 = math.rsqrt %79 : vector<4x1x16xf32>
    %81 = vector.broadcast %80 : vector<4x1x16xf32> to vector<4x16x16xf32>
    %82 = arith.mulf %77, %81 : vector<4x16x16xf32>
    %83 = vector.shape_cast %63 : vector<16x1xf32> to vector<1x16x1xf32>
    %84 = vector.broadcast %83 : vector<1x16x1xf32> to vector<4x16x16xf32>
    %85 = arith.mulf %82, %84 : vector<4x16x16xf32>
    %86 = vector.shape_cast %64 : vector<16x1xf32> to vector<1x16x1xf32>
    %87 = vector.broadcast %86 : vector<1x16x1xf32> to vector<4x16x16xf32>
    %88 = arith.addf %85, %87 : vector<4x16x16xf32>
    %cst_39 = arith.constant 5.000000e-01 : f32
    %89 = vector.broadcast %cst_39 : f32 to vector<4x16x16xf32>
    %90 = arith.mulf %89, %88 : vector<4x16x16xf32>
    %cst_40 = arith.constant 0.707106769 : f32
    %91 = vector.broadcast %cst_40 : f32 to vector<4x16x16xf32>
    %92 = arith.mulf %88, %91 : vector<4x16x16xf32>
    %93 = math.erf %92 : vector<4x16x16xf32>
    %cst_41 = arith.constant 1.000000e+00 : f32
    %94 = vector.broadcast %cst_41 : f32 to vector<4x16x16xf32>
    %95 = arith.addf %94, %93 : vector<4x16x16xf32>
    %96 = arith.mulf %90, %95 : vector<4x16x16xf32>
    %97 = vector.shape_cast %96 : vector<4x16x16xf32> to vector<64x16xf32>
    %c1_i32_42 = arith.constant 1 : i32
    %98 = tpu.dynamic_rotate %97 by %c1_i32_42 dim 1 : vector<64x16xf32>, i32 -> vector<64x16xf32>
    %cst_43 = arith.constant 0.000000e+00 : f32
    %99 = vector.broadcast %cst_43 : f32 to vector<64x16xf32>
    %100 = arith.select %4, %98, %99 : vector<64x16xi1>, vector<64x16xf32>
    %c0_44 = arith.constant 0 : index
    %c0_45 = arith.constant 0 : index
    %c0_46 = arith.constant 0 : index
    %101 = vector.load %arg8[%c0_44, %c0_45, %c0_46] : memref<3x64x64xf32, #tpu.memory_space<vmem>>, vector<1x64x64xf32>
    %102 = vector.shape_cast %101 : vector<1x64x64xf32> to vector<64x64xf32>
    %cst_47 = arith.constant dense<0.000000e+00> : vector<64x16xf32>
    %103 = tpu.matmul %102, %100, %cst_47 {dimension_numbers = #tpu.dot_dimension_numbers<[1], [0], [0], [1], [0, 0, 1, 1], [], []>} : vector<64x64xf32>, vector<64x16xf32>, vector<64x16xf32> -> vector<64x16xf32>
    %c1_48 = arith.constant 1 : index
    %c0_49 = arith.constant 0 : index
    %c0_50 = arith.constant 0 : index
    %104 = vector.load %arg8[%c1_48, %c0_49, %c0_50] : memref<3x64x64xf32, #tpu.memory_space<vmem>>, vector<1x64x64xf32>
    %105 = vector.shape_cast %104 : vector<1x64x64xf32> to vector<64x64xf32>
    %cst_51 = arith.constant dense<0.000000e+00> : vector<64x16xf32>
    %106 = tpu.matmul %105, %97, %cst_51 {dimension_numbers = #tpu.dot_dimension_numbers<[1], [0], [0], [1], [0, 0, 1, 1], [], []>} : vector<64x64xf32>, vector<64x16xf32>, vector<64x16xf32> -> vector<64x16xf32>
    %107 = arith.addf %103, %106 : vector<64x16xf32>
    %c15_i32_52 = arith.constant 15 : i32
    %108 = tpu.dynamic_rotate %97 by %c15_i32_52 dim 1 : vector<64x16xf32>, i32 -> vector<64x16xf32>
    %cst_53 = arith.constant 0.000000e+00 : f32
    %109 = vector.broadcast %cst_53 : f32 to vector<64x16xf32>
    %110 = arith.select %6, %108, %109 : vector<64x16xi1>, vector<64x16xf32>
    %c2_54 = arith.constant 2 : index
    %c0_55 = arith.constant 0 : index
    %c0_56 = arith.constant 0 : index
    %111 = vector.load %arg8[%c2_54, %c0_55, %c0_56] : memref<3x64x64xf32, #tpu.memory_space<vmem>>, vector<1x64x64xf32>
    %112 = vector.shape_cast %111 : vector<1x64x64xf32> to vector<64x64xf32>
    %cst_57 = arith.constant dense<0.000000e+00> : vector<64x16xf32>
    %113 = tpu.matmul %112, %110, %cst_57 {dimension_numbers = #tpu.dot_dimension_numbers<[1], [0], [0], [1], [0, 0, 1, 1], [], []>} : vector<64x64xf32>, vector<64x16xf32>, vector<64x16xf32> -> vector<64x16xf32>
    %114 = arith.addf %107, %113 : vector<64x16xf32>
    %c0_58 = arith.constant 0 : index
    %c0_59 = arith.constant 0 : index
    %115 = vector.load %arg9[%c0_58, %c0_59] : memref<64x1xf32, #tpu.memory_space<vmem>>, vector<64x1xf32>
    %116 = vector.broadcast %115 : vector<64x1xf32> to vector<64x16xf32>
    %117 = arith.addf %114, %116 : vector<64x16xf32>
    %118 = vector.shape_cast %1 : vector<4x16x16xf32> to vector<64x16xf32>
    %119 = arith.addf %117, %118 : vector<64x16xf32>
    %120 = vector.shape_cast %119 : vector<64x16xf32> to vector<4x16x16xf32>
    %c0_60 = arith.constant 0 : index
    %c0_61 = arith.constant 0 : index
    %c0_62 = arith.constant 0 : index
    %c0_63 = arith.constant 0 : index
    %121 = vector.load %arg10[%c0_60, %c0_61, %c0_62, %c0_63] : memref<1x4x16x16xf32, #tpu.memory_space<vmem>>, vector<1x4x16x16xf32>
    %122 = vector.shape_cast %121 : vector<1x4x16x16xf32> to vector<4x16x16xf32>
    %123 = vector.shape_cast %120 : vector<4x16x16xf32> to vector<1x4x16x16xf32>
    tpu.vector_store %arg10[%c0_60, %c0_61, %c0_62, %c0_63], %123 {strides = array<i32>} : memref<1x4x16x16xf32, #tpu.memory_space<vmem>>, vector<1x4x16x16xf32>,
    return
  }
  func.func @transform_0(%arg0: i32) -> (i32, i32, i32, i32) {
    %c0_i32 = arith.constant 0 : i32
    %c0_i32_0 = arith.constant 0 : i32
    %c0_i32_1 = arith.constant 0 : i32
    %c0_i32_2 = arith.constant 0 : i32
    return %arg0, %c0_i32, %c0_i32_0, %c0_i32_1 : i32, i32, i32, i32
  }
  func.func @transform_1(%arg0: i32) -> (i32, i32) {
    %c0_i32 = arith.constant 0 : i32
    %c0_i32_0 = arith.constant 0 : i32
    %c0_i32_1 = arith.constant 0 : i32
    return %c0_i32, %c0_i32_0 : i32, i32
  }
  func.func @transform_2(%arg0: i32) -> (i32, i32) {
    %c0_i32 = arith.constant 0 : i32
    %c0_i32_0 = arith.constant 0 : i32
    %c0_i32_1 = arith.constant 0 : i32
    return %c0_i32, %c0_i32_0 : i32, i32
  }
  func.func @transform_3(%arg0: i32) -> (i32, i32, i32) {
    %c0_i32 = arith.constant 0 : i32
    %c0_i32_0 = arith.constant 0 : i32
    %c0_i32_1 = arith.constant 0 : i32
    %c0_i32_2 = arith.constant 0 : i32
    return %c0_i32, %c0_i32_0, %c0_i32_1 : i32, i32, i32
  }
  func.func @transform_4(%arg0: i32) -> (i32, i32) {
    %c0_i32 = arith.constant 0 : i32
    %c0_i32_0 = arith.constant 0 : i32
    %c0_i32_1 = arith.constant 0 : i32
    return %c0_i32, %c0_i32_0 : i32, i32
  }
  func.func @transform_5(%arg0: i32) -> (i32, i32) {
    %c0_i32 = arith.constant 0 : i32
    %c0_i32_0 = arith.constant 0 : i32
    %c0_i32_1 = arith.constant 0 : i32
    return %c0_i32, %c0_i32_0 : i32, i32
  }
  func.func @transform_6(%arg0: i32) -> (i32, i32) {
    %c0_i32 = arith.constant 0 : i32
    %c0_i32_0 = arith.constant 0 : i32
    %c0_i32_1 = arith.constant 0 : i32
    return %c0_i32, %c0_i32_0 : i32, i32
  }
  func.func @transform_7(%arg0: i32) -> (i32, i32, i32) {
    %c0_i32 = arith.constant 0 : i32
    %c0_i32_0 = arith.constant 0 : i32
    %c0_i32_1 = arith.constant 0 : i32
    %c0_i32_2 = arith.constant 0 : i32
    return %c0_i32, %c0_i32_0, %c0_i32_1 : i32, i32, i32
  }
  func.func @transform_8(%arg0: i32) -> (i32, i32) {
    %c0_i32 = arith.constant 0 : i32
    %c0_i32_0 = arith.constant 0 : i32
    %c0_i32_1 = arith.constant 0 : i32
    return %c0_i32, %c0_i32_0 : i32, i32
  }
  func.func @transform_9(%arg0: i32) -> (i32, i32, i32, i32) {
    %c0_i32 = arith.constant 0 : i32
    %c0_i32_0 = arith.constant 0 : i32
    %c0_i32_1 = arith.constant 0 : i32
    %c0_i32_2 = arith.constant 0 : i32
    return %arg0, %c0_i32, %c0_i32_0, %c0_i32_1 : i32, i32, i32, i32
  }
}

</mosaic_0001>

<llo_original>
// kernel: tpu_custom_call.1
$region0: #{tpu_custom_call.1}
  #allocation0 [shape = 'u32[]', space=smem, size = 0x4, offset = 0x4, fixed_abs, tag = 'smem constant byte address 0x4 - core index']
  #allocation1 [shape = 'u32[144,128]{1,0:T(1,128)}', space=vmem, size = 0x12000, scoped, tag = 'internal scratch']
  %s0 = inlined_call_operand.hbm [shape: f32[2,4,16,16], index: 0, kind: input, shape index: {}]
  %s1 = inlined_call_operand.vmem [shape: f32[16,1], index: 1, kind: input, shape index: {}]
  %s2 = inlined_call_operand.vmem [shape: f32[16,1], index: 2, kind: input, shape index: {}]
  %s3 = inlined_call_operand.vmem [shape: f32[3,64,64], index: 3, kind: input, shape index: {}]
  %s4 = inlined_call_operand.vmem [shape: f32[64,1], index: 4, kind: input, shape index: {}]
  %s5 = inlined_call_operand.vmem [shape: f32[16,1], index: 5, kind: input, shape index: {}]
  %s6 = inlined_call_operand.vmem [shape: f32[16,1], index: 6, kind: input, shape index: {}]
  %s7 = inlined_call_operand.hbm [shape: f32[3,64,64], index: 7, kind: input, shape index: {}]
  %s8 = inlined_call_operand.vmem [shape: f32[64,1], index: 8, kind: input, shape index: {}]
  %s9 = inlined_call_operand.hbm [shape: f32[2,4,16,16], index: 9, kind: output, shape index: {}]
  %s10 = sld [smem:[#allocation0]]
  $region77: #{tpu_custom_call.1} parent=0
    _
  %s12 = ssub.s32 1, %s10
  %s13 = scalar_select 0, %s12, %s10
  $region1: #{tpu_custom_call.1} parent=0
    #allocation2 [shape = 'u8[65536]{0}', space=vmem, size = 0x10000, scoped, tag = 'input window, operand 0']
    #allocation3 [shape = 's32[2]{0}', space=sflag, size = 0x8, scoped, tag = 'scoped memory for tpu_custom_call.1']
    #allocation4 [shape = 's32[2]{0}', space=sflag, size = 0x8, scoped, tag = 'scoped memory for tpu_custom_call.1']
    #allocation5 [shape = 'u8[98304]{0}', space=vmem, size = 0x18000, scoped, tag = 'input window, operand 7, single buffered']
    #allocation6 [shape = 's32[1]{0}', space=sflag, size = 0x4, scoped, tag = 'scoped memory for tpu_custom_call.1']
    #allocation7 [shape = 'u8[65536]{0}', space=vmem, size = 0x10000, scoped, tag = 'output window, operand 0']
    %14 = vsyncpa [#allocation3], 0
    %s15 = scalar_lea.sflag [#allocation3], 1
    %16 = vsyncpa %s15, 0
    %17 = vsyncpa [#allocation6], 0
    %18 = vsyncpa [#allocation4], 0
    %s19 = scalar_lea.sflag [#allocation4], 1
    %20 = vsyncpa %s19, 0
    loop: start=0, step=1, limit=4
    $region2: #{tpu_custom_call.1} parent=1 // loop_pre_header
      _
    $region3: #{tpu_custom_call.1} parent=1 // loop_header
      %s22 = sphi 0, %s26
      %p23 = scmp.ge.s32.totalorder %s22, 4
      %s32 = sphi 0, %s34
      %s35 = sphi 0, %s32
      %s36 = sphi 0, %s35
      %s52 = sphi 0, %s36
      %s56 = sphi 0, %s56
      %s58 = sphi 0, %s56
      %s59 = sphi 0, %s58
      %s73 = sphi 0, %s59
      %s77 = sphi 0, %s77
      %s79 = sphi 0, %s77
      %s80 = sphi 0, %s79
      %s94 = sphi 0, %s80
      %s98 = sphi 0, %s98
      %s100 = sphi 0, %s98
      %s101 = sphi 0, %s100
      %s115 = sphi 0, %s101
      %s119 = sphi 0, %s119
      %s121 = sphi 0, %s119
      %s122 = sphi 0, %s121
      %s136 = sphi 0, %s122
      %s140 = sphi 0, %s140
      %s142 = sphi 0, %s140
      %s143 = sphi 0, %s142
      %s157 = sphi 0, %s143
      %s161 = sphi 0, %s161
      %s163 = sphi 0, %s161
      %s164 = sphi 0, %s163
      %s178 = sphi 0, %s164
      %s182 = sphi 0, %s182
      %s184 = sphi 0, %s182
      %s185 = sphi 0, %s184
      %s199 = sphi 0, %s185
      %s203 = sphi 0, %s203
      %s205 = sphi 0, %s203
      %s206 = sphi 0, %s205
      %s220 = sphi 0, %s206
      %s226 = sphi 0, %s228
      %s229 = sphi 0, %s226
      %s230 = sphi 0, %s229
      %s246 = sphi 0, %s230
    $region4: #{tpu_custom_call.1} parent=1 // loop_header_branch
      %25 = sbr.rel (%p23) target = $region8
    $region5: #{tpu_custom_call.1} parent=1 // loop_body
      %s27 = ssub.s32 %s22, 1
      %s28 = ssub.s32 %s22, 2
      %s29 = sadd.s32 %s22, 1
      %s30 = ssub.s32 %s22, %s29
      %p31 = scmp.eq.s32.totalorder %s30, 0
      %s33 = sadd.s32 %s32, 1
      %s34 = scalar_select %p31, %s32, %s33
      %p37 = pneg %p31
      %p38 = scmp.eq.s32.totalorder %s22, 1
      %p39 = por %p37, %p38
      %p40 = scmp.ne.s32.totalorder %s32, %s35
      %p41 = scmp.eq.s32.totalorder %s22, 0
      %p42 = por %p40, %p41
      %p43 = scmp.ne.s32.totalorder %s32, %s35
      %p44 = scmp.eq.s32.totalorder %s27, 1
      %p45 = por %p43, %p44
      %p46 = scmp.ne.s32.totalorder %s35, %s36
      %p47 = scmp.eq.s32.totalorder %s27, 0
      %p48 = por %p46, %p47
      %p49 = scmp.ne.s32.totalorder %s35, %s36
      %p50 = scmp.eq.s32.totalorder %s28, 1
      %p51 = por %p49, %p50
      %p53 = scmp.ne.s32.totalorder %s36, %s52
      %p54 = scmp.eq.s32.totalorder %s28, 0
      %p55 = por %p53, %p54
      %s57 = sadd.s32 %s56, 1
      %p60 = scmp.eq.s32.totalorder %s22, 1
      %p61 = scmp.ne.s32.totalorder %s56, %s58
      %p62 = scmp.eq.s32.totalorder %s22, 0
      %p63 = por %p61, %p62
      %p64 = scmp.ne.s32.totalorder %s56, %s58
      %p65 = scmp.eq.s32.totalorder %s27, 1
      %p66 = por %p64, %p65
      %p67 = scmp.ne.s32.totalorder %s58, %s59
      %p68 = scmp.eq.s32.totalorder %s27, 0
      %p69 = por %p67, %p68
      %p70 = scmp.ne.s32.totalorder %s58, %s59
      %p71 = scmp.eq.s32.totalorder %s28, 1
      %p72 = por %p70, %p71
      %p74 = scmp.ne.s32.totalorder %s59, %s73
      %p75 = scmp.eq.s32.totalorder %s28, 0
      %p76 = por %p74, %p75
      %s78 = sadd.s32 %s77, 1
      %p81 = scmp.eq.s32.totalorder %s22, 1
      %p82 = scmp.ne.s32.totalorder %s77, %s79
      %p83 = scmp.eq.s32.totalorder %s22, 0
      %p84 = por %p82, %p83
      %p85 = scmp.ne.s32.totalorder %s77, %s79
      %p86 = scmp.eq.s32.totalorder %s27, 1
      %p87 = por %p85, %p86
      %p88 = scmp.ne.s32.totalorder %s79, %s80
      %p89 = scmp.eq.s32.totalorder %s27, 0
      %p90 = por %p88, %p89
      %p91 = scmp.ne.s32.totalorder %s79, %s80
      %p92 = scmp.eq.s32.totalorder %s28, 1
      %p93 = por %p91, %p92
      %p95 = scmp.ne.s32.totalorder %s80, %s94
      %p96 = scmp.eq.s32.totalorder %s28, 0
      %p97 = por %p95, %p96
      %s99 = sadd.s32 %s98, 1
      %p102 = scmp.eq.s32.totalorder %s22, 1
      %p103 = scmp.ne.s32.totalorder %s98, %s100
      %p104 = scmp.eq.s32.totalorder %s22, 0
      %p105 = por %p103, %p104
      %p106 = scmp.ne.s32.totalorder %s98, %s100
      %p107 = scmp.eq.s32.totalorder %s27, 1
      %p108 = por %p106, %p107
      %p109 = scmp.ne.s32.totalorder %s100, %s101
      %p110 = scmp.eq.s32.totalorder %s27, 0
      %p111 = por %p109, %p110
      %p112 = scmp.ne.s32.totalorder %s100, %s101
      %p113 = scmp.eq.s32.totalorder %s28, 1
      %p114 = por %p112, %p113
      %p116 = scmp.ne.s32.totalorder %s101, %s115
      %p117 = scmp.eq.s32.totalorder %s28, 0
      %p118 = por %p116, %p117
      %s120 = sadd.s32 %s119, 1
      %p123 = scmp.eq.s32.totalorder %s22, 1
      %p124 = scmp.ne.s32.totalorder %s119, %s121
      %p125 = scmp.eq.s32.totalorder %s22, 0
      %p126 = por %p124, %p125
      %p127 = scmp.ne.s32.totalorder %s119, %s121
      %p128 = scmp.eq.s32.totalorder %s27, 1
      %p129 = por %p127, %p128
      %p130 = scmp.ne.s32.totalorder %s121, %s122
      %p131 = scmp.eq.s32.totalorder %s27, 0
      %p132 = por %p130, %p131
      %p133 = scmp.ne.s32.totalorder %s121, %s122
      %p134 = scmp.eq.s32.totalorder %s28, 1
      %p135 = por %p133, %p134
      %p137 = scmp.ne.s32.totalorder %s122, %s136
      %p138 = scmp.eq.s32.totalorder %s28, 0
      %p139 = por %p137, %p138
      %s141 = sadd.s32 %s140, 1
      %p144 = scmp.eq.s32.totalorder %s22, 1
      %p145 = scmp.ne.s32.totalorder %s140, %s142
      %p146 = scmp.eq.s32.totalorder %s22, 0
      %p147 = por %p145, %p146
      %p148 = scmp.ne.s32.totalorder %s140, %s142
      %p149 = scmp.eq.s32.totalorder %s27, 1
      %p150 = por %p148, %p149
      %p151 = scmp.ne.s32.totalorder %s142, %s143
      %p152 = scmp.eq.s32.totalorder %s27, 0
      %p153 = por %p151, %p152
      %p154 = scmp.ne.s32.totalorder %s142, %s143
      %p155 = scmp.eq.s32.totalorder %s28, 1
      %p156 = por %p154, %p155
      %p158 = scmp.ne.s32.totalorder %s143, %s157
      %p159 = scmp.eq.s32.totalorder %s28, 0
      %p160 = por %p158, %p159
      %s162 = sadd.s32 %s161, 1
      %p165 = scmp.eq.s32.totalorder %s22, 1
      %p166 = scmp.ne.s32.totalorder %s161, %s163
      %p167 = scmp.eq.s32.totalorder %s22, 0
      %p168 = por %p166, %p167
      %p169 = scmp.ne.s32.totalorder %s161, %s163
      %p170 = scmp.eq.s32.totalorder %s27, 1
      %p171 = por %p169, %p170
      %p172 = scmp.ne.s32.totalorder %s163, %s164
      %p173 = scmp.eq.s32.totalorder %s27, 0
      %p174 = por %p172, %p173
      %p175 = scmp.ne.s32.totalorder %s163, %s164
      %p176 = scmp.eq.s32.totalorder %s28, 1
      %p177 = por %p175, %p176
      %p179 = scmp.ne.s32.totalorder %s164, %s178
      %p180 = scmp.eq.s32.totalorder %s28, 0
      %p181 = por %p179, %p180
      %s183 = sadd.s32 %s182, 1
      %p186 = scmp.eq.s32.totalorder %s22, 1
      %p187 = scmp.ne.s32.totalorder %s182, %s184
      %p188 = scmp.eq.s32.totalorder %s22, 0
      %p189 = por %p187, %p188
      %p190 = scmp.ne.s32.totalorder %s182, %s184
      %p191 = scmp.eq.s32.totalorder %s27, 1
      %p192 = por %p190, %p191
      %p193 = scmp.ne.s32.totalorder %s184, %s185
      %p194 = scmp.eq.s32.totalorder %s27, 0
      %p195 = por %p193, %p194
      %p196 = scmp.ne.s32.totalorder %s184, %s185
      %p197 = scmp.eq.s32.totalorder %s28, 1
      %p198 = por %p196, %p197
      %p200 = scmp.ne.s32.totalorder %s185, %s199
      %p201 = scmp.eq.s32.totalorder %s28, 0
      %p202 = por %p200, %p201
      %s204 = sadd.s32 %s203, 1
      %p207 = scmp.eq.s32.totalorder %s22, 1
      %p208 = scmp.ne.s32.totalorder %s203, %s205
      %p209 = scmp.eq.s32.totalorder %s22, 0
      %p210 = por %p208, %p209
      %p211 = scmp.ne.s32.totalorder %s203, %s205
      %p212 = scmp.eq.s32.totalorder %s27, 1
      %p213 = por %p211, %p212
      %p214 = scmp.ne.s32.totalorder %s205, %s206
      %p215 = scmp.eq.s32.totalorder %s27, 0
      %p216 = por %p214, %p215
      %p217 = scmp.ne.s32.totalorder %s205, %s206
      %p218 = scmp.eq.s32.totalorder %s28, 1
      %p219 = por %p217, %p218
      %p221 = scmp.ne.s32.totalorder %s206, %s220
      %p222 = scmp.eq.s32.totalorder %s28, 0
      %p223 = por %p221, %p222
      %s224 = ssub.s32 %s22, %s29
      %p225 = scmp.eq.s32.totalorder %s224, 0
      %s227 = sadd.s32 %s226, 1
      %s228 = scalar_select %p225, %s226, %s227
      %p231 = pneg %p225
      %p232 = scmp.eq.s32.totalorder %s22, 1
      %p233 = por %p231, %p232
      %p234 = scmp.ne.s32.totalorder %s226, %s229
      %p235 = scmp.eq.s32.totalorder %s22, 0
      %p236 = por %p234, %p235
      %p237 = scmp.ne.s32.totalorder %s226, %s229
      %p238 = scmp.eq.s32.totalorder %s27, 1
      %p239 = por %p237, %p238
      %p240 = scmp.ne.s32.totalorder %s229, %s230
      %p241 = scmp.eq.s32.totalorder %s27, 0
      %p242 = por %p240, %p241
      %p243 = scmp.ne.s32.totalorder %s229, %s230
      %p244 = scmp.eq.s32.totalorder %s28, 1
      %p245 = por %p243, %p244
      %p247 = scmp.ne.s32.totalorder %s230, %s246
      %p248 = scmp.eq.s32.totalorder %s28, 0
      %p249 = por %p247, %p248
      %p250 = scmp.le.s32.totalorder 1, %s22
      %p251 = scmp.lt.s32.totalorder %s22, 3
      %p252 = pnand %p250, %p251
      %p253 = pneg %p252
      // Predicated region
      $region9: #{tpu_custom_call.1} parent=5 // pred_check
        _
      $region10: #{tpu_custom_call.1} parent=5 // pred_check_branch
        %255 = sbr.rel (%p252) target = $region12
      $region11: #{tpu_custom_call.1} parent=5 // pred_region
        %s256 = ssub.s32 %s22, 1
        // Predicated region
        $region13: #{tpu_custom_call.1} parent=11 // pred_check
          %p257 = pneg %p69
        $region14: #{tpu_custom_call.1} parent=11 // pred_check_branch
          %259 = sbr.rel (%p257) target = $region16
        $region15: #{tpu_custom_call.1} parent=11 // pred_region
          _
        $region16: #{tpu_custom_call.1} parent=11 // pred_fallthru
          _
        // Predicated region
        $region17: #{tpu_custom_call.1} parent=11 // pred_check
          %p260 = pneg %p90
        $region18: #{tpu_custom_call.1} parent=11 // pred_check_branch
          %262 = sbr.rel (%p260) target = $region20
        $region19: #{tpu_custom_call.1} parent=11 // pred_region
          _
        $region20: #{tpu_custom_call.1} parent=11 // pred_fallthru
          _
        // Predicated region
        $region21: #{tpu_custom_call.1} parent=11 // pred_check
          %p263 = pneg %p111
        $region22: #{tpu_custom_call.1} parent=11 // pred_check_branch
          %265 = sbr.rel (%p263) target = $region24
        $region23: #{tpu_custom_call.1} parent=11 // pred_region
          _
        $region24: #{tpu_custom_call.1} parent=11 // pred_fallthru
          _
        // Predicated region
        $region25: #{tpu_custom_call.1} parent=11 // pred_check
          %p266 = pneg %p132
        $region26: #{tpu_custom_call.1} parent=11 // pred_check_branch
          %268 = sbr.rel (%p266) target = $region28
        $region27: #{tpu_custom_call.1} parent=11 // pred_region
          _
        $region28: #{tpu_custom_call.1} parent=11 // pred_fallthru
          _
        // Predicated region
        $region29: #{tpu_custom_call.1} parent=11 // pred_check
          %p269 = pneg %p153
        $region30: #{tpu_custom_call.1} parent=11 // pred_check_branch
          %271 = sbr.rel (%p269) target = $region32
        $region31: #{tpu_custom_call.1} parent=11 // pred_region
          _
        $region32: #{tpu_custom_call.1} parent=11 // pred_fallthru
          _
        // Predicated region
        $region33: #{tpu_custom_call.1} parent=11 // pred_check
          %p272 = pneg %p174
        $region34: #{tpu_custom_call.1} parent=11 // pred_check_branch
          %274 = sbr.rel (%p272) target = $region36
        $region35: #{tpu_custom_call.1} parent=11 // pred_region
          _
        $region36: #{tpu_custom_call.1} parent=11 // pred_fallthru
          _
        // Predicated region
        $region37: #{tpu_custom_call.1} parent=11 // pred_check
          %p275 = pneg %p195
        $region38: #{tpu_custom_call.1} parent=11 // pred_check_branch
          %277 = sbr.rel (%p275) target = $region40
        $region39: #{tpu_custom_call.1} parent=11 // pred_region
          %s279 = ssub.s32 3072, 3072
          %280 = vsyncadd [#allocation6], %s279
          %s281 = sshll.u32 [#allocation5], 4
          %s282 = int_to_ptr.vmem [resolvable:$true] %s281
          %287 = dma.hbm_to_vmem [thread:$0]  %s7, 3072, %s282, [#allocation6], 128, 128, 8
        $region40: #{tpu_custom_call.1} parent=11 // pred_fallthru
          _
        // Predicated region
        $region41: #{tpu_custom_call.1} parent=11 // pred_check
          %p288 = pneg %p216
        $region42: #{tpu_custom_call.1} parent=11 // pred_check_branch
          %290 = sbr.rel (%p288) target = $region44
        $region43: #{tpu_custom_call.1} parent=11 // pred_region
          _
        $region44: #{tpu_custom_call.1} parent=11 // pred_fallthru
          _
      $region12: #{tpu_custom_call.1} parent=5 // pred_fallthru
        _
      %p291 = scmp.lt.s32.totalorder %s22, 2
      // Predicated region
      $region45: #{tpu_custom_call.1} parent=5 // pred_check
        %p292 = pneg %p291
      $region46: #{tpu_custom_call.1} parent=5 // pred_check_branch
        %294 = sbr.rel (%p292) target = $region48
      $region47: #{tpu_custom_call.1} parent=5 // pred_region
        // Predicated region
        $region49: #{tpu_custom_call.1} parent=47 // pred_check
          %p295 = pneg %p42
        $region50: #{tpu_custom_call.1} parent=47 // pred_check_branch
          %297 = sbr.rel (%p295) target = $region52
        $region51: #{tpu_custom_call.1} parent=47 // pred_region
          %s298 = sand.u32 %s32, 1
          %s299 = scalar_lea.sflag [#allocation3], %s298
          %s300 = sand.u32 %s32, 1
          %s301 = smul.addr %s300, 64
          %s302 = scalar_lea.vmem [#allocation2], %s301
          %s304 = ssub.s32 1024, 1024
          %305 = vsyncadd %s299, %s304
          %s306 = smul.addr %s22, 8
          %s307 = smul.addr %s306, 128
          %s308 = scalar_lea.hbm %s0, %s307
          %s309 = sshll.u32 %s302, 4
          %s310 = int_to_ptr.vmem [resolvable:$true] %s309
          %315 = dma.hbm_to_vmem [thread:$0]  %s308, 1024, %s310, %s299, 128, 128, 8
        $region52: #{tpu_custom_call.1} parent=47 // pred_fallthru
          _
      $region48: #{tpu_custom_call.1} parent=5 // pred_fallthru
        _
      %p316 = scmp.le.s32.totalorder 1, %s22
      %p317 = scmp.lt.s32.totalorder %s22, 3
      %p318 = pnand %p316, %p317
      %p319 = pneg %p318
      // Predicated region
      $region53: #{tpu_custom_call.1} parent=5 // pred_check
        _
      $region54: #{tpu_custom_call.1} parent=5 // pred_check_branch
        %321 = sbr.rel (%p318) target = $region56
      $region55: #{tpu_custom_call.1} parent=5 // pred_region
        %s322 = ssub.s32 %s22, 1
        %s323 = sand.u32 %s35, 1
        %s324 = scalar_lea.sflag [#allocation3], %s323
        %s325 = sand.u32 %s35, 1
        %s326 = smul.addr %s325, 64
        %s327 = scalar_lea.vmem [#allocation2], %s326
        // Predicated region
        $region57: #{tpu_custom_call.1} parent=55 // pred_check
          %p328 = pneg %p48
        $region58: #{tpu_custom_call.1} parent=55 // pred_check_branch
          %330 = sbr.rel (%p328) target = $region60
        $region59: #{tpu_custom_call.1} parent=55 // pred_region
          %331 = dma.done %s324, 1024
        $region60: #{tpu_custom_call.1} parent=55 // pred_fallthru
          _
        // Predicated region
        $region61: #{tpu_custom_call.1} parent=55 // pred_check
          %p332 = pneg %p195
        $region62: #{tpu_custom_call.1} parent=55 // pred_check_branch
          %334 = sbr.rel (%p332) target = $region64
        $region63: #{tpu_custom_call.1} parent=55 // pred_region
          %335 = dma.done [#allocation6], 3072
        $region64: #{tpu_custom_call.1} parent=55 // pred_fallthru
          _
        %s336 = sand.u32 %s35, 1
        %s337 = scalar_lea.sflag [#allocation3], %s336
        %s338 = sand.u32 %s35, 1
        %s339 = smul.addr %s338, 64
        %s340 = scalar_lea.vmem [#allocation2], %s339
        %p341 = pneg %p48
        %p342 = pneg %p45
        %p343 = pneg %p69
        %p344 = pneg %p66
        %p345 = pneg %p90
        %p346 = pneg %p87
        %p347 = pneg %p111
        %p348 = pneg %p108
        %p349 = pneg %p132
        %p350 = pneg %p129
        %p351 = pneg %p153
        %p352 = pneg %p150
        %p353 = pneg %p174
        %p354 = pneg %p171
        %p355 = pneg %p195
        %p356 = pneg %p192
        %p357 = pneg %p216
        %p358 = pneg %p213
        %p359 = pneg %p242
        %p360 = pneg %p239
        %s361 = sand.u32 %s229, 1
        %s362 = scalar_lea.sflag [#allocation4], %s361
        %s363 = sand.u32 %s229, 1
        %s364 = smul.addr %s363, 64
        %s365 = scalar_lea.vmem [#allocation7], %s364
        %v366 = vld [vmem:[%s327] sm:$0xff]
        %v367 = vld [vmem:[%s327 + $0x8] sm:$0xff]
        %v368 = vld [vmem:[%s327 + $0x10] sm:$0xff]
        %v369 = vld [vmem:[%s327 + $0x18] sm:$0xff]
        %v370 = vld [vmem:[%s327 + $0x20] sm:$0xff]
        %v371 = vld [vmem:[%s327 + $0x28] sm:$0xff]
        %v372 = vld [vmem:[%s327 + $0x30] sm:$0xff]
        %v373 = vld [vmem:[%s327 + $0x38] sm:$0xff]
        %v374 = vlaneseq
        %v375 = vand.u32 %v374, 127
        %vm376 = vcmp.ge.s32.totalorder %v375, 1
        %vm377 = vcmp.lt.s32.totalorder %v375, 15
        %v378 = vld [vmem:[%s1] sm:$0xff]
        %v379 = vld [vmem:[%s1 + $0x8] sm:$0xff]
        %v380 = vld [vmem:[%s2] sm:$0xff]
        %v381 = vld [vmem:[%s2 + $0x8] sm:$0xff]
        %vm382 = vcmask 130048
        %v383 = vsel %vm382, %v366, 0.0
        %v384 = vsel %vm382, %v367, 0.0
        %v385 = vadd.f32 %v383, %v384
        %v386 = vrot.slane %v385, 4
        %v387 = vadd.f32 %v385, %v386
        %v388 = vrot.slane %v387, 2
        %v389 = vadd.f32 %v387, %v388
        %v390 = vrot.slane %v389, 1
        %v391 = vadd.f32 %v389, %v390
        %v392 = vsel %vm382, %v368, 0.0
        %v393 = vsel %vm382, %v369, 0.0
        %v394 = vadd.f32 %v392, %v393
        %v395 = vrot.slane %v394, 4
        %v396 = vadd.f32 %v394, %v395
        %v397 = vrot.slane %v396, 2
        %v398 = vadd.f32 %v396, %v397
        %v399 = vrot.slane %v398, 1
        %v400 = vadd.f32 %v398, %v399
        %v401 = vsel %vm382, %v370, 0.0
        %v402 = vsel %vm382, %v371, 0.0
        %v403 = vadd.f32 %v401, %v402
        %v404 = vrot.slane %v403, 4
        %v405 = vadd.f32 %v403, %v404
        %v406 = vrot.slane %v405, 2
        %v407 = vadd.f32 %v405, %v406
        %v408 = vrot.slane %v407, 1
        %v409 = vadd.f32 %v407, %v408
        %v410 = vsel %vm382, %v372, 0.0
        %v411 = vsel %vm382, %v373, 0.0
        %v412 = vadd.f32 %v410, %v411
        %v413 = vrot.slane %v412, 4
        %v414 = vadd.f32 %v412, %v413
        %v415 = vrot.slane %v414, 2
        %v416 = vadd.f32 %v414, %v415
        %v417 = vrot.slane %v416, 1
        %v418 = vadd.f32 %v416, %v417
        %v419 = vrcp.pop 16.0
        %v420 = vmul.f32 %v391, %v419
        %v421 = vmul.f32 %v400, %v419
        %v422 = vmul.f32 %v409, %v419
        %v423 = vmul.f32 %v418, %v419
        %v424 = vsub.f32 %v366, %v420
        %v425 = vsub.f32 %v367, %v420
        %v426 = vsub.f32 %v368, %v421
        %v427 = vsub.f32 %v369, %v421
        %v428 = vsub.f32 %v370, %v422
        %v429 = vsub.f32 %v371, %v422
        %v430 = vsub.f32 %v372, %v423
        %v431 = vsub.f32 %v373, %v423
        %v432 = vmul.f32 %v424, %v424
        %v433 = vmul.f32 %v425, %v425
        %v434 = vmul.f32 %v426, %v426
        %v435 = vmul.f32 %v427, %v427
        %v436 = vmul.f32 %v428, %v428
        %v437 = vmul.f32 %v429, %v429
        %v438 = vmul.f32 %v430, %v430
        %v439 = vmul.f32 %v431, %v431
        %v440 = vsel %vm382, %v432, 0.0
        %v441 = vsel %vm382, %v433, 0.0
        %v442 = vadd.f32 %v440, %v441
        %v443 = vrot.slane %v442, 4
        %v444 = vadd.f32 %v442, %v443
        %v445 = vrot.slane %v444, 2
        %v446 = vadd.f32 %v444, %v445
        %v447 = vrot.slane %v446, 1
        %v448 = vadd.f32 %v446, %v447
        %v449 = vsel %vm382, %v434, 0.0
        %v450 = vsel %vm382, %v435, 0.0
        %v451 = vadd.f32 %v449, %v450
        %v452 = vrot.slane %v451, 4
        %v453 = vadd.f32 %v451, %v452
        %v454 = vrot.slane %v453, 2
        %v455 = vadd.f32 %v453, %v454
        %v456 = vrot.slane %v455, 1
        %v457 = vadd.f32 %v455, %v456
        %v458 = vsel %vm382, %v436, 0.0
        %v459 = vsel %vm382, %v437, 0.0
        %v460 = vadd.f32 %v458, %v459
        %v461 = vrot.slane %v460, 4
        %v462 = vadd.f32 %v460, %v461
        %v463 = vrot.slane %v462, 2
        %v464 = vadd.f32 %v462, %v463
        %v465 = vrot.slane %v464, 1
        %v466 = vadd.f32 %v464, %v465
        %v467 = vsel %vm382, %v438, 0.0
        %v468 = vsel %vm382, %v439, 0.0
        %v469 = vadd.f32 %v467, %v468
        %v470 = vrot.slane %v469, 4
        %v471 = vadd.f32 %v469, %v470
        %v472 = vrot.slane %v471, 2
        %v473 = vadd.f32 %v471, %v472
        %v474 = vrot.slane %v473, 1
        %v475 = vadd.f32 %v473, %v474
        %v476 = vmul.f32 %v448, %v419
        %v477 = vmul.f32 %v457, %v419
        %v478 = vmul.f32 %v466, %v419
        %v479 = vmul.f32 %v475, %v419
        %v480 = vadd.f32 %v476, 1e-05
        %v481 = vadd.f32 %v477, 1e-05
        %v482 = vadd.f32 %v478, 1e-05
        %v483 = vadd.f32 %v479, 1e-05
        %v484 = vrsqrt.pop %v480
        %v485 = vrsqrt.pop %v481
        %v486 = vrsqrt.pop %v482
        %v487 = vrsqrt.pop %v483
        %v488 = vmul.f32 %v424, %v484
        %v489 = vmul.f32 %v425, %v484
        %v490 = vmul.f32 %v426, %v485
        %v491 = vmul.f32 %v427, %v485
        %v492 = vmul.f32 %v428, %v486
        %v493 = vmul.f32 %v429, %v486
        %v494 = vmul.f32 %v430, %v487
        %v495 = vmul.f32 %v431, %v487
        %497 = vset.pattern.permute.xlu0 0
        %498 = vperm.xlu0 %497, %v378
        %v499 = vpop.permute.xlu0 %498
        %502 = vset.pattern.permute.xlu0 0
        %503 = vperm.xlu0 %502, %v379
        %v504 = vpop.permute.xlu0 %503
        %v506 = vmul.f32 %v488, %v499
        %v507 = vmul.f32 %v489, %v504
        %v508 = vmul.f32 %v490, %v499
        %v509 = vmul.f32 %v491, %v504
        %v510 = vmul.f32 %v492, %v499
        %v511 = vmul.f32 %v493, %v504
        %v512 = vmul.f32 %v494, %v499
        %v513 = vmul.f32 %v495, %v504
        %515 = vset.pattern.permute.xlu0 0
        %516 = vperm.xlu0 %515, %v380
        %v517 = vpop.permute.xlu0 %516
        %520 = vset.pattern.permute.xlu0 0
        %521 = vperm.xlu0 %520, %v381
        %v522 = vpop.permute.xlu0 %521
        %v524 = vadd.f32 %v506, %v517
        %v525 = vadd.f32 %v507, %v522
        %v526 = vadd.f32 %v508, %v517
        %v527 = vadd.f32 %v509, %v522
        %v528 = vadd.f32 %v510, %v517
        %v529 = vadd.f32 %v511, %v522
        %v530 = vadd.f32 %v512, %v517
        %v531 = vadd.f32 %v513, %v522
        %v532 = vmul.f32 %v524, 0.5
        %v533 = vmul.f32 %v525, 0.5
        %v534 = vmul.f32 %v526, 0.5
        %v535 = vmul.f32 %v527, 0.5
        %v536 = vmul.f32 %v528, 0.5
        %v537 = vmul.f32 %v529, 0.5
        %v538 = vmul.f32 %v530, 0.5
        %v539 = vmul.f32 %v531, 0.5
        %v540 = vmul.f32 %v524, 0.70710677
        %v541 = vmul.f32 %v525, 0.70710677
        %v542 = vmul.f32 %v526, 0.70710677
        %v543 = vmul.f32 %v527, 0.70710677
        %v544 = vmul.f32 %v528, 0.70710677
        %v545 = vmul.f32 %v529, 0.70710677
        %v546 = vmul.f32 %v530, 0.70710677
        %v547 = vmul.f32 %v531, 0.70710677
        %v548 = verf.f32.pop %v540
        %v549 = verf.f32.pop %v541
        %v550 = verf.f32.pop %v542
        %v551 = verf.f32.pop %v543
        %v552 = verf.f32.pop %v544
        %v553 = verf.f32.pop %v545
        %v554 = verf.f32.pop %v546
        %v555 = verf.f32.pop %v547
        %v556 = vadd.f32 %v548, 1.0
        %v557 = vadd.f32 %v549, 1.0
        %v558 = vadd.f32 %v550, 1.0
        %v559 = vadd.f32 %v551, 1.0
        %v560 = vadd.f32 %v552, 1.0
        %v561 = vadd.f32 %v553, 1.0
        %v562 = vadd.f32 %v554, 1.0
        %v563 = vadd.f32 %v555, 1.0
        %v564 = vmul.f32 %v532, %v556
        %v565 = vmul.f32 %v533, %v557
        %v566 = vmul.f32 %v534, %v558
        %v567 = vmul.f32 %v535, %v559
        %v568 = vmul.f32 %v536, %v560
        %v569 = vmul.f32 %v537, %v561
        %v570 = vmul.f32 %v538, %v562
        %v571 = vmul.f32 %v539, %v563
        %vm572 = vcmask 1047680
        %573 = vrot.lane.b32.xlu0 %v564, 16
        %v574 = vpop.permute.xlu0 %573
        %v575 = vsel %vm572, %v574, %v564
        %576 = vrot.lane.b32.xlu0 %v565, 16
        %v577 = vpop.permute.xlu0 %576
        %v578 = vsel %vm572, %v577, %v565
        %579 = vrot.lane.b32.xlu0 %v566, 16
        %v580 = vpop.permute.xlu0 %579
        %v581 = vsel %vm572, %v580, %v566
        %582 = vrot.lane.b32.xlu0 %v567, 16
        %v583 = vpop.permute.xlu0 %582
        %v584 = vsel %vm572, %v583, %v567
        %585 = vrot.lane.b32.xlu0 %v568, 16
        %v586 = vpop.permute.xlu0 %585
        %v587 = vsel %vm572, %v586, %v568
        %588 = vrot.lane.b32.xlu0 %v569, 16
        %v589 = vpop.permute.xlu0 %588
        %v590 = vsel %vm572, %v589, %v569
        %591 = vrot.lane.b32.xlu0 %v570, 16
        %v592 = vpop.permute.xlu0 %591
        %v593 = vsel %vm572, %v592, %v570
        %594 = vrot.lane.b32.xlu0 %v571, 16
        %v595 = vpop.permute.xlu0 %594
        %v596 = vsel %vm572, %v595, %v571
        %597 = vrot.lane.b32.xlu0 %v575, 16
        %v598 = vpop.permute.xlu0 %597
        %599 = vrot.lane.b32.xlu0 %v578, 16
        %v600 = vpop.permute.xlu0 %599
        %601 = vrot.lane.b32.xlu0 %v581, 16
        %v602 = vpop.permute.xlu0 %601
        %603 = vrot.lane.b32.xlu0 %v584, 16
        %v604 = vpop.permute.xlu0 %603
        %605 = vrot.lane.b32.xlu0 %v587, 16
        %v606 = vpop.permute.xlu0 %605
        %607 = vrot.lane.b32.xlu0 %v590, 16
        %v608 = vpop.permute.xlu0 %607
        %609 = vrot.lane.b32.xlu0 %v593, 16
        %v610 = vpop.permute.xlu0 %609
        %611 = vrot.lane.b32.xlu0 %v596, 16
        %v612 = vpop.permute.xlu0 %611
        %v613 = vsel %vm572, %v598, %v564
        %v614 = vsel %vm572, %v600, %v565
        %v615 = vsel %vm572, %v602, %v566
        %v616 = vsel %vm572, %v604, %v567
        %v617 = vsel %vm572, %v606, %v568
        %v618 = vsel %vm572, %v608, %v569
        %v619 = vsel %vm572, %v610, %v570
        %v620 = vsel %vm572, %v612, %v571
        %629 = vrot.lane.b32.xlu0 %v613, 113
        %v630 = vpop.permute.xlu0 %629
        %631 = vrot.lane.b32.xlu0 %v614, 113
        %v632 = vpop.permute.xlu0 %631
        %633 = vrot.lane.b32.xlu0 %v615, 113
        %v634 = vpop.permute.xlu0 %633
        %635 = vrot.lane.b32.xlu0 %v616, 113
        %v636 = vpop.permute.xlu0 %635
        %637 = vrot.lane.b32.xlu0 %v617, 113
        %v638 = vpop.permute.xlu0 %637
        %639 = vrot.lane.b32.xlu0 %v618, 113
        %v640 = vpop.permute.xlu0 %639
        %641 = vrot.lane.b32.xlu0 %v619, 113
        %v642 = vpop.permute.xlu0 %641
        %643 = vrot.lane.b32.xlu0 %v620, 113
        %v644 = vpop.permute.xlu0 %643
        %v653 = vsel %vm376, %v630, 0.0
        %v654 = vsel %vm376, %v632, 0.0
        %v655 = vsel %vm376, %v634, 0.0
        %v656 = vsel %vm376, %v636, 0.0
        %v657 = vsel %vm376, %v638, 0.0
        %v658 = vsel %vm376, %v640, 0.0
        %v659 = vsel %vm376, %v642, 0.0
        %v660 = vsel %vm376, %v644, 0.0
        %v661 = vld [vmem:[%s3] sm:$0xff]
        %v662 = vld [vmem:[%s3 + $0x8] sm:$0xff]
        %v663 = vld [vmem:[%s3 + $0x10] sm:$0xff]
        %v664 = vld [vmem:[%s3 + $0x18] sm:$0xff]
        %v665 = vld [vmem:[%s3 + $0x20] sm:$0xff]
        %v666 = vld [vmem:[%s3 + $0x28] sm:$0xff]
        %v667 = vld [vmem:[%s3 + $0x30] sm:$0xff]
        %v668 = vld [vmem:[%s3 + $0x38] sm:$0xff]
        %s669 = scalar_lea.vmem %s3, 64
        %v670 = vld [vmem:[%s669] sm:$0xff]
        %v671 = vld [vmem:[%s669 + $0x8] sm:$0xff]
        %v672 = vld [vmem:[%s669 + $0x10] sm:$0xff]
        %v673 = vld [vmem:[%s669 + $0x18] sm:$0xff]
        %v674 = vld [vmem:[%s669 + $0x20] sm:$0xff]
        %v675 = vld [vmem:[%s669 + $0x28] sm:$0xff]
        %v676 = vld [vmem:[%s669 + $0x30] sm:$0xff]
        %v677 = vld [vmem:[%s669 + $0x38] sm:$0xff]
        %vm678 = vcmask 523264
        %v680 = vsel %vm678, %v670, 0
        %v683 = vsel %vm678, %v671, 0
        %v686 = vsel %vm678, %v672, 0
        %v689 = vsel %vm678, %v673, 0
        %v692 = vsel %vm678, %v674, 0
        %v695 = vsel %vm678, %v675, 0
        %v698 = vsel %vm678, %v676, 0
        %v701 = vsel %vm678, %v677, 0
        %703 = vmatprep.subr.mxu0 0.0
        %704 = vmatpush1.msra.mxu0 0.0
        %705 = vmatprep.subr.mxu0 0.0
        %706 = vmatpush1.msra.mxu0 0.0
        %707 = vmatprep.subr.mxu0 0.0
        %708 = vmatpush1.msra.mxu0 0.0
        %709 = vmatprep.subr.mxu0 0.0
        %710 = vmatpush1.msra.mxu0 0.0
        %711 = vmatprep.subr.mxu0 0.0
        %712 = vmatpush1.msra.mxu0 0.0
        %713 = vmatprep.subr.mxu0 0.0
        %714 = vmatpush1.msra.mxu0 0.0
        %715 = vmatprep.subr.mxu0 0.0
        %716 = vmatpush1.msra.mxu0 0.0
        %717 = vmatprep.subr.mxu0 0.0
        %718 = vmatpush1.msra.mxu0 0.0
        %719 = vmatprep.subr.mxu0 0.0
        %720 = vmatpush1.msra.mxu0 %v571
        %721 = vmatprep.subr.mxu0 0.0
        %722 = vmatpush1.msra.mxu0 %v570
        %723 = vmatprep.subr.mxu0 0.0
        %724 = vmatpush1.msra.mxu0 %v569
        %725 = vmatprep.subr.mxu0 0.0
        %726 = vmatpush1.msra.mxu0 %v568
        %727 = vmatprep.subr.mxu0 0.0
        %728 = vmatpush1.msra.mxu0 %v567
        %729 = vmatprep.subr.mxu0 0.0
        %730 = vmatpush1.msra.mxu0 %v566
        %731 = vmatprep.subr.mxu0 0.0
        %732 = vmatpush1.msra.mxu0 %v565
        %733 = vmatprep.subr.mxu0 0.0
        %734 = vmatpush1.msra.mxu0 %v564
        %735 = vmatprep.subr.mxu0 0.0
        %736 = vmatpush2.msra.mxu0 0.0
        %737 = vmatprep.subr.mxu0 0.0
        %738 = vmatpush2.msra.mxu0 0.0
        %739 = vmatprep.subr.mxu0 0.0
        %740 = vmatpush2.msra.mxu0 0.0
        %741 = vmatprep.subr.mxu0 0.0
        %742 = vmatpush2.msra.mxu0 0.0
        %743 = vmatprep.subr.mxu0 0.0
        %744 = vmatpush2.msra.mxu0 0.0
        %745 = vmatprep.subr.mxu0 0.0
        %746 = vmatpush2.msra.mxu0 0.0
        %747 = vmatprep.subr.mxu0 0.0
        %748 = vmatpush2.msra.mxu0 0.0
        %749 = vmatprep.subr.mxu0 0.0
        %750 = vmatpush2.msra.mxu0 0.0
        %751 = vmatprep.subr.mxu0 0.0
        %752 = vmatpush2.msra.mxu0 0.0
        %753 = vmatprep.subr.mxu0 0.0
        %754 = vmatpush2.msra.mxu0 0.0
        %755 = vmatprep.subr.mxu0 0.0
        %756 = vmatpush2.msra.mxu0 0.0
        %757 = vmatprep.subr.mxu0 0.0
        %758 = vmatpush2.msra.mxu0 0.0
        %759 = vmatprep.subr.mxu0 0.0
        %760 = vmatpush2.msra.mxu0 0.0
        %761 = vmatprep.subr.mxu0 0.0
        %762 = vmatpush2.msra.mxu0 0.0
        %763 = vmatprep.subr.mxu0 0.0
        %764 = vmatpush2.msra.mxu0 0.0
        %765 = vmatprep.subr.mxu0 0.0
        %766 = vmatpush2.msra.mxu0 0.0
        %767 = vmatprep.mubr.f32.mxu0 0.0
        %768 = vmatmul.mubr.f32.gmra.mxu0 %v680
        %v769 = vpop.f32.mrf.mxu0
        %v770 = vadd.f32 0.0, %v769
        %v771 = vpop.f32.mrf.mxu0
        %772 = vmatprep.mubr.f32.mxu0 0.0
        %773 = vmatmul.mubr.f32.gmra.mxu0 %v683
        %v774 = vpop.f32.mrf.mxu0
        %v775 = vadd.f32 0.0, %v774
        %v776 = vpop.f32.mrf.mxu0
        %777 = vmatprep.mubr.f32.mxu0 0.0
        %778 = vmatmul.mubr.f32.gmra.mxu0 %v686
        %v779 = vpop.f32.mrf.mxu0
        %v780 = vadd.f32 0.0, %v779
        %v781 = vpop.f32.mrf.mxu0
        %782 = vmatprep.mubr.f32.mxu0 0.0
        %783 = vmatmul.mubr.f32.gmra.mxu0 %v689
        %v784 = vpop.f32.mrf.mxu0
        %v785 = vadd.f32 0.0, %v784
        %v786 = vpop.f32.mrf.mxu0
        %787 = vmatprep.mubr.f32.mxu0 0.0
        %788 = vmatmul.mubr.f32.gmra.mxu0 %v692
        %v789 = vpop.f32.mrf.mxu0
        %v790 = vadd.f32 0.0, %v789
        %v791 = vpop.f32.mrf.mxu0
        %792 = vmatprep.mubr.f32.mxu0 0.0
        %793 = vmatmul.mubr.f32.gmra.mxu0 %v695
        %v794 = vpop.f32.mrf.mxu0
        %v795 = vadd.f32 0.0, %v794
        %v796 = vpop.f32.mrf.mxu0
        %797 = vmatprep.mubr.f32.mxu0 0.0
        %798 = vmatmul.mubr.f32.gmra.mxu0 %v698
        %v799 = vpop.f32.mrf.mxu0
        %v800 = vadd.f32 0.0, %v799
        %v801 = vpop.f32.mrf.mxu0
        %802 = vmatprep.mubr.f32.mxu0 0.0
        %803 = vmatmul.mubr.f32.gmra.mxu0 %v701
        %v804 = vpop.f32.mrf.mxu0
        %v805 = vadd.f32 0.0, %v804
        %v806 = vpop.f32.mrf.mxu0
        %807 = vdwg.mxu0
        %v809 = vsel %vm678, %v661, 0
        %v812 = vsel %vm678, %v662, 0
        %v815 = vsel %vm678, %v663, 0
        %v818 = vsel %vm678, %v664, 0
        %v821 = vsel %vm678, %v665, 0
        %v824 = vsel %vm678, %v666, 0
        %v827 = vsel %vm678, %v667, 0
        %v830 = vsel %vm678, %v668, 0
        %832 = vmatprep.subr.mxu0 0.0
        %833 = vmatpush1.msra.mxu0 0.0
        %834 = vmatprep.subr.mxu0 0.0
        %835 = vmatpush1.msra.mxu0 0.0
        %836 = vmatprep.subr.mxu0 0.0
        %837 = vmatpush1.msra.mxu0 0.0
        %838 = vmatprep.subr.mxu0 0.0
        %839 = vmatpush1.msra.mxu0 0.0
        %840 = vmatprep.subr.mxu0 0.0
        %841 = vmatpush1.msra.mxu0 0.0
        %842 = vmatprep.subr.mxu0 0.0
        %843 = vmatpush1.msra.mxu0 0.0
        %844 = vmatprep.subr.mxu0 0.0
        %845 = vmatpush1.msra.mxu0 0.0
        %846 = vmatprep.subr.mxu0 0.0
        %847 = vmatpush1.msra.mxu0 0.0
        %848 = vmatprep.subr.mxu0 0.0
        %849 = vmatpush1.msra.mxu0 %v660
        %850 = vmatprep.subr.mxu0 0.0
        %851 = vmatpush1.msra.mxu0 %v659
        %852 = vmatprep.subr.mxu0 0.0
        %853 = vmatpush1.msra.mxu0 %v658
        %854 = vmatprep.subr.mxu0 0.0
        %855 = vmatpush1.msra.mxu0 %v657
        %856 = vmatprep.subr.mxu0 0.0
        %857 = vmatpush1.msra.mxu0 %v656
        %858 = vmatprep.subr.mxu0 0.0
        %859 = vmatpush1.msra.mxu0 %v655
        %860 = vmatprep.subr.mxu0 0.0
        %861 = vmatpush1.msra.mxu0 %v654
        %862 = vmatprep.subr.mxu0 0.0
        %863 = vmatpush1.msra.mxu0 %v653
        %864 = vmatprep.subr.mxu0 0.0
        %865 = vmatpush2.msra.mxu0 0.0
        %866 = vmatprep.subr.mxu0 0.0
        %867 = vmatpush2.msra.mxu0 0.0
        %868 = vmatprep.subr.mxu0 0.0
        %869 = vmatpush2.msra.mxu0 0.0
        %870 = vmatprep.subr.mxu0 0.0
        %871 = vmatpush2.msra.mxu0 0.0
        %872 = vmatprep.subr.mxu0 0.0
        %873 = vmatpush2.msra.mxu0 0.0
        %874 = vmatprep.subr.mxu0 0.0
        %875 = vmatpush2.msra.mxu0 0.0
        %876 = vmatprep.subr.mxu0 0.0
        %877 = vmatpush2.msra.mxu0 0.0
        %878 = vmatprep.subr.mxu0 0.0
        %879 = vmatpush2.msra.mxu0 0.0
        %880 = vmatprep.subr.mxu0 0.0
        %881 = vmatpush2.msra.mxu0 0.0
        %882 = vmatprep.subr.mxu0 0.0
        %883 = vmatpush2.msra.mxu0 0.0
        %884 = vmatprep.subr.mxu0 0.0
        %885 = vmatpush2.msra.mxu0 0.0
        %886 = vmatprep.subr.mxu0 0.0
        %887 = vmatpush2.msra.mxu0 0.0
        %888 = vmatprep.subr.mxu0 0.0
        %889 = vmatpush2.msra.mxu0 0.0
        %890 = vmatprep.subr.mxu0 0.0
        %891 = vmatpush2.msra.mxu0 0.0
        %892 = vmatprep.subr.mxu0 0.0
        %893 = vmatpush2.msra.mxu0 0.0
        %894 = vmatprep.subr.mxu0 0.0
        %895 = vmatpush2.msra.mxu0 0.0
        %896 = vmatprep.mubr.f32.mxu0 0.0
        %897 = vmatmul.mubr.f32.gmra.mxu0 %v809
        %v898 = vpop.f32.mrf.mxu0
        %v899 = vadd.f32 %v770, %v898
        %v900 = vpop.f32.mrf.mxu0
        %901 = vmatprep.mubr.f32.mxu0 0.0
        %902 = vmatmul.mubr.f32.gmra.mxu0 %v812
        %v903 = vpop.f32.mrf.mxu0
        %v904 = vadd.f32 %v775, %v903
        %v905 = vpop.f32.mrf.mxu0
        %906 = vmatprep.mubr.f32.mxu0 0.0
        %907 = vmatmul.mubr.f32.gmra.mxu0 %v815
        %v908 = vpop.f32.mrf.mxu0
        %v909 = vadd.f32 %v780, %v908
        %v910 = vpop.f32.mrf.mxu0
        %911 = vmatprep.mubr.f32.mxu0 0.0
        %912 = vmatmul.mubr.f32.gmra.mxu0 %v818
        %v913 = vpop.f32.mrf.mxu0
        %v914 = vadd.f32 %v785, %v913
        %v915 = vpop.f32.mrf.mxu0
        %916 = vmatprep.mubr.f32.mxu0 0.0
        %917 = vmatmul.mubr.f32.gmra.mxu0 %v821
        %v918 = vpop.f32.mrf.mxu0
        %v919 = vadd.f32 %v790, %v918
        %v920 = vpop.f32.mrf.mxu0
        %921 = vmatprep.mubr.f32.mxu0 0.0
        %922 = vmatmul.mubr.f32.gmra.mxu0 %v824
        %v923 = vpop.f32.mrf.mxu0
        %v924 = vadd.f32 %v795, %v923
        %v925 = vpop.f32.mrf.mxu0
        %926 = vmatprep.mubr.f32.mxu0 0.0
        %927 = vmatmul.mubr.f32.gmra.mxu0 %v827
        %v928 = vpop.f32.mrf.mxu0
        %v929 = vadd.f32 %v800, %v928
        %v930 = vpop.f32.mrf.mxu0
        %931 = vmatprep.mubr.f32.mxu0 0.0
        %932 = vmatmul.mubr.f32.gmra.mxu0 %v830
        %v933 = vpop.f32.mrf.mxu0
        %v934 = vadd.f32 %v805, %v933
        %v935 = vpop.f32.mrf.mxu0
        %936 = vdwg.mxu0
        %937 = vrot.lane.b32.xlu0 %v613, 127
        %v938 = vpop.permute.xlu0 %937
        %939 = vrot.lane.b32.xlu0 %v614, 127
        %v940 = vpop.permute.xlu0 %939
        %941 = vrot.lane.b32.xlu0 %v615, 127
        %v942 = vpop.permute.xlu0 %941
        %943 = vrot.lane.b32.xlu0 %v616, 127
        %v944 = vpop.permute.xlu0 %943
        %945 = vrot.lane.b32.xlu0 %v617, 127
        %v946 = vpop.permute.xlu0 %945
        %947 = vrot.lane.b32.xlu0 %v618, 127
        %v948 = vpop.permute.xlu0 %947
        %949 = vrot.lane.b32.xlu0 %v619, 127
        %v950 = vpop.permute.xlu0 %949
        %951 = vrot.lane.b32.xlu0 %v620, 127
        %v952 = vpop.permute.xlu0 %951
        %v961 = vsel %vm377, %v938, 0.0
        %v962 = vsel %vm377, %v940, 0.0
        %v963 = vsel %vm377, %v942, 0.0
        %v964 = vsel %vm377, %v944, 0.0
        %v965 = vsel %vm377, %v946, 0.0
        %v966 = vsel %vm377, %v948, 0.0
        %v967 = vsel %vm377, %v950, 0.0
        %v968 = vsel %vm377, %v952, 0.0
        %s969 = scalar_lea.vmem %s3, 128
        %v970 = vld [vmem:[%s969] sm:$0xff]
        %v971 = vld [vmem:[%s969 + $0x8] sm:$0xff]
        %v972 = vld [vmem:[%s969 + $0x10] sm:$0xff]
        %v973 = vld [vmem:[%s969 + $0x18] sm:$0xff]
        %v974 = vld [vmem:[%s969 + $0x20] sm:$0xff]
        %v975 = vld [vmem:[%s969 + $0x28] sm:$0xff]
        %v976 = vld [vmem:[%s969 + $0x30] sm:$0xff]
        %v977 = vld [vmem:[%s969 + $0x38] sm:$0xff]
        %v979 = vsel %vm678, %v970, 0
        %v982 = vsel %vm678, %v971, 0
        %v985 = vsel %vm678, %v972, 0
        %v988 = vsel %vm678, %v973, 0
        %v991 = vsel %vm678, %v974, 0
        %v994 = vsel %vm678, %v975, 0
        %v997 = vsel %vm678, %v976, 0
        %v1000 = vsel %vm678, %v977, 0
        %1002 = vmatprep.subr.mxu0 0.0
        %1003 = vmatpush1.msra.mxu0 0.0
        %1004 = vmatprep.subr.mxu0 0.0
        %1005 = vmatpush1.msra.mxu0 0.0
        %1006 = vmatprep.subr.mxu0 0.0
        %1007 = vmatpush1.msra.mxu0 0.0
        %1008 = vmatprep.subr.mxu0 0.0
        %1009 = vmatpush1.msra.mxu0 0.0
        %1010 = vmatprep.subr.mxu0 0.0
        %1011 = vmatpush1.msra.mxu0 0.0
        %1012 = vmatprep.subr.mxu0 0.0
        %1013 = vmatpush1.msra.mxu0 0.0
        %1014 = vmatprep.subr.mxu0 0.0
        %1015 = vmatpush1.msra.mxu0 0.0
        %1016 = vmatprep.subr.mxu0 0.0
        %1017 = vmatpush1.msra.mxu0 0.0
        %1018 = vmatprep.subr.mxu0 0.0
        %1019 = vmatpush1.msra.mxu0 %v968
        %1020 = vmatprep.subr.mxu0 0.0
        %1021 = vmatpush1.msra.mxu0 %v967
        %1022 = vmatprep.subr.mxu0 0.0
        %1023 = vmatpush1.msra.mxu0 %v966
        %1024 = vmatprep.subr.mxu0 0.0
        %1025 = vmatpush1.msra.mxu0 %v965
        %1026 = vmatprep.subr.mxu0 0.0
        %1027 = vmatpush1.msra.mxu0 %v964
        %1028 = vmatprep.subr.mxu0 0.0
        %1029 = vmatpush1.msra.mxu0 %v963
        %1030 = vmatprep.subr.mxu0 0.0
        %1031 = vmatpush1.msra.mxu0 %v962
        %1032 = vmatprep.subr.mxu0 0.0
        %1033 = vmatpush1.msra.mxu0 %v961
        %1034 = vmatprep.subr.mxu0 0.0
        %1035 = vmatpush2.msra.mxu0 0.0
        %1036 = vmatprep.subr.mxu0 0.0
        %1037 = vmatpush2.msra.mxu0 0.0
        %1038 = vmatprep.subr.mxu0 0.0
        %1039 = vmatpush2.msra.mxu0 0.0
        %1040 = vmatprep.subr.mxu0 0.0
        %1041 = vmatpush2.msra.mxu0 0.0
        %1042 = vmatprep.subr.mxu0 0.0
        %1043 = vmatpush2.msra.mxu0 0.0
        %1044 = vmatprep.subr.mxu0 0.0
        %1045 = vmatpush2.msra.mxu0 0.0
        %1046 = vmatprep.subr.mxu0 0.0
        %1047 = vmatpush2.msra.mxu0 0.0
        %1048 = vmatprep.subr.mxu0 0.0
        %1049 = vmatpush2.msra.mxu0 0.0
        %1050 = vmatprep.subr.mxu0 0.0
        %1051 = vmatpush2.msra.mxu0 0.0
        %1052 = vmatprep.subr.mxu0 0.0
        %1053 = vmatpush2.msra.mxu0 0.0
        %1054 = vmatprep.subr.mxu0 0.0
        %1055 = vmatpush2.msra.mxu0 0.0
        %1056 = vmatprep.subr.mxu0 0.0
        %1057 = vmatpush2.msra.mxu0 0.0
        %1058 = vmatprep.subr.mxu0 0.0
        %1059 = vmatpush2.msra.mxu0 0.0
        %1060 = vmatprep.subr.mxu0 0.0
        %1061 = vmatpush2.msra.mxu0 0.0
        %1062 = vmatprep.subr.mxu0 0.0
        %1063 = vmatpush2.msra.mxu0 0.0
        %1064 = vmatprep.subr.mxu0 0.0
        %1065 = vmatpush2.msra.mxu0 0.0
        %1066 = vmatprep.mubr.f32.mxu0 0.0
        %1067 = vmatmul.mubr.f32.gmra.mxu0 %v979
        %v1068 = vpop.f32.mrf.mxu0
        %v1069 = vadd.f32 0.0, %v1068
        %v1070 = vpop.f32.mrf.mxu0
        %1071 = vmatprep.mubr.f32.mxu0 0.0
        %1072 = vmatmul.mubr.f32.gmra.mxu0 %v982
        %v1073 = vpop.f32.mrf.mxu0
        %v1074 = vadd.f32 0.0, %v1073
        %v1075 = vpop.f32.mrf.mxu0
        %1076 = vmatprep.mubr.f32.mxu0 0.0
        %1077 = vmatmul.mubr.f32.gmra.mxu0 %v985
        %v1078 = vpop.f32.mrf.mxu0
        %v1079 = vadd.f32 0.0, %v1078
        %v1080 = vpop.f32.mrf.mxu0
        %1081 = vmatprep.mubr.f32.mxu0 0.0
        %1082 = vmatmul.mubr.f32.gmra.mxu0 %v988
        %v1083 = vpop.f32.mrf.mxu0
        %v1084 = vadd.f32 0.0, %v1083
        %v1085 = vpop.f32.mrf.mxu0
        %1086 = vmatprep.mubr.f32.mxu0 0.0
        %1087 = vmatmul.mubr.f32.gmra.mxu0 %v991
        %v1088 = vpop.f32.mrf.mxu0
        %v1089 = vadd.f32 0.0, %v1088
        %v1090 = vpop.f32.mrf.mxu0
        %1091 = vmatprep.mubr.f32.mxu0 0.0
        %1092 = vmatmul.mubr.f32.gmra.mxu0 %v994
        %v1093 = vpop.f32.mrf.mxu0
        %v1094 = vadd.f32 0.0, %v1093
        %v1095 = vpop.f32.mrf.mxu0
        %1096 = vmatprep.mubr.f32.mxu0 0.0
        %1097 = vmatmul.mubr.f32.gmra.mxu0 %v997
        %v1098 = vpop.f32.mrf.mxu0
        %v1099 = vadd.f32 0.0, %v1098
        %v1100 = vpop.f32.mrf.mxu0
        %1101 = vmatprep.mubr.f32.mxu0 0.0
        %1102 = vmatmul.mubr.f32.gmra.mxu0 %v1000
        %v1103 = vpop.f32.mrf.mxu0
        %v1104 = vadd.f32 0.0, %v1103
        %v1105 = vpop.f32.mrf.mxu0
        %1106 = vdwg.mxu0
        %v1107 = vadd.f32 %v899, %v1069
        %v1108 = vadd.f32 %v904, %v1074
        %v1109 = vadd.f32 %v909, %v1079
        %v1110 = vadd.f32 %v914, %v1084
        %v1111 = vadd.f32 %v919, %v1089
        %v1112 = vadd.f32 %v924, %v1094
        %v1113 = vadd.f32 %v929, %v1099
        %v1114 = vadd.f32 %v934, %v1104
        %v1115 = vld [vmem:[%s4] sm:$0xff]
        %v1116 = vld [vmem:[%s4 + $0x8] sm:$0xff]
        %v1117 = vld [vmem:[%s4 + $0x10] sm:$0xff]
        %v1118 = vld [vmem:[%s4 + $0x18] sm:$0xff]
        %v1119 = vld [vmem:[%s4 + $0x20] sm:$0xff]
        %v1120 = vld [vmem:[%s4 + $0x28] sm:$0xff]
        %v1121 = vld [vmem:[%s4 + $0x30] sm:$0xff]
        %v1122 = vld [vmem:[%s4 + $0x38] sm:$0xff]
        %1124 = vset.pattern.permute.xlu0 0
        %1125 = vperm.xlu0 %1124, %v1115
        %v1126 = vpop.permute.xlu0 %1125
        %1129 = vset.pattern.permute.xlu0 0
        %1130 = vperm.xlu0 %1129, %v1116
        %v1131 = vpop.permute.xlu0 %1130
        %1134 = vset.pattern.permute.xlu0 0
        %1135 = vperm.xlu0 %1134, %v1117
        %v1136 = vpop.permute.xlu0 %1135
        %1139 = vset.pattern.permute.xlu0 0
        %1140 = vperm.xlu0 %1139, %v1118
        %v1141 = vpop.permute.xlu0 %1140
        %1144 = vset.pattern.permute.xlu0 0
        %1145 = vperm.xlu0 %1144, %v1119
        %v1146 = vpop.permute.xlu0 %1145
        %1149 = vset.pattern.permute.xlu0 0
        %1150 = vperm.xlu0 %1149, %v1120
        %v1151 = vpop.permute.xlu0 %1150
        %1154 = vset.pattern.permute.xlu0 0
        %1155 = vperm.xlu0 %1154, %v1121
        %v1156 = vpop.permute.xlu0 %1155
        %1159 = vset.pattern.permute.xlu0 0
        %1160 = vperm.xlu0 %1159, %v1122
        %v1161 = vpop.permute.xlu0 %1160
        %v1163 = vadd.f32 %v1107, %v1126
        %v1164 = vadd.f32 %v1108, %v1131
        %v1165 = vadd.f32 %v1109, %v1136
        %v1166 = vadd.f32 %v1110, %v1141
        %v1167 = vadd.f32 %v1111, %v1146
        %v1168 = vadd.f32 %v1112, %v1151
        %v1169 = vadd.f32 %v1113, %v1156
        %v1170 = vadd.f32 %v1114, %v1161
        %v1171 = vld [vmem:[%s5] sm:$0xff]
        %v1172 = vld [vmem:[%s5 + $0x8] sm:$0xff]
        %v1173 = vld [vmem:[%s6] sm:$0xff]
        %v1174 = vld [vmem:[%s6 + $0x8] sm:$0xff]
        %v1175 = vsel %vm382, %v1163, 0.0
        %v1176 = vsel %vm382, %v1164, 0.0
        %v1177 = vadd.f32 %v1175, %v1176
        %v1178 = vrot.slane %v1177, 4
        %v1179 = vadd.f32 %v1177, %v1178
        %v1180 = vrot.slane %v1179, 2
        %v1181 = vadd.f32 %v1179, %v1180
        %v1182 = vrot.slane %v1181, 1
        %v1183 = vadd.f32 %v1181, %v1182
        %v1184 = vsel %vm382, %v1165, 0.0
        %v1185 = vsel %vm382, %v1166, 0.0
        %v1186 = vadd.f32 %v1184, %v1185
        %v1187 = vrot.slane %v1186, 4
        %v1188 = vadd.f32 %v1186, %v1187
        %v1189 = vrot.slane %v1188, 2
        %v1190 = vadd.f32 %v1188, %v1189
        %v1191 = vrot.slane %v1190, 1
        %v1192 = vadd.f32 %v1190, %v1191
        %v1193 = vsel %vm382, %v1167, 0.0
        %v1194 = vsel %vm382, %v1168, 0.0
        %v1195 = vadd.f32 %v1193, %v1194
        %v1196 = vrot.slane %v1195, 4
        %v1197 = vadd.f32 %v1195, %v1196
        %v1198 = vrot.slane %v1197, 2
        %v1199 = vadd.f32 %v1197, %v1198
        %v1200 = vrot.slane %v1199, 1
        %v1201 = vadd.f32 %v1199, %v1200
        %v1202 = vsel %vm382, %v1169, 0.0
        %v1203 = vsel %vm382, %v1170, 0.0
        %v1204 = vadd.f32 %v1202, %v1203
        %v1205 = vrot.slane %v1204, 4
        %v1206 = vadd.f32 %v1204, %v1205
        %v1207 = vrot.slane %v1206, 2
        %v1208 = vadd.f32 %v1206, %v1207
        %v1209 = vrot.slane %v1208, 1
        %v1210 = vadd.f32 %v1208, %v1209
        %v1211 = vmul.f32 %v1183, %v419
        %v1212 = vmul.f32 %v1192, %v419
        %v1213 = vmul.f32 %v1201, %v419
        %v1214 = vmul.f32 %v1210, %v419
        %v1215 = vsub.f32 %v1163, %v1211
        %v1216 = vsub.f32 %v1164, %v1211
        %v1217 = vsub.f32 %v1165, %v1212
        %v1218 = vsub.f32 %v1166, %v1212
        %v1219 = vsub.f32 %v1167, %v1213
        %v1220 = vsub.f32 %v1168, %v1213
        %v1221 = vsub.f32 %v1169, %v1214
        %v1222 = vsub.f32 %v1170, %v1214
        %v1223 = vmul.f32 %v1215, %v1215
        %v1224 = vmul.f32 %v1216, %v1216
        %v1225 = vmul.f32 %v1217, %v1217
        %v1226 = vmul.f32 %v1218, %v1218
        %v1227 = vmul.f32 %v1219, %v1219
        %v1228 = vmul.f32 %v1220, %v1220
        %v1229 = vmul.f32 %v1221, %v1221
        %v1230 = vmul.f32 %v1222, %v1222
        %v1231 = vsel %vm382, %v1223, 0.0
        %v1232 = vsel %vm382, %v1224, 0.0
        %v1233 = vadd.f32 %v1231, %v1232
        %v1234 = vrot.slane %v1233, 4
        %v1235 = vadd.f32 %v1233, %v1234
        %v1236 = vrot.slane %v1235, 2
        %v1237 = vadd.f32 %v1235, %v1236
        %v1238 = vrot.slane %v1237, 1
        %v1239 = vadd.f32 %v1237, %v1238
        %v1240 = vsel %vm382, %v1225, 0.0
        %v1241 = vsel %vm382, %v1226, 0.0
        %v1242 = vadd.f32 %v1240, %v1241
        %v1243 = vrot.slane %v1242, 4
        %v1244 = vadd.f32 %v1242, %v1243
        %v1245 = vrot.slane %v1244, 2
        %v1246 = vadd.f32 %v1244, %v1245
        %v1247 = vrot.slane %v1246, 1
        %v1248 = vadd.f32 %v1246, %v1247
        %v1249 = vsel %vm382, %v1227, 0.0
        %v1250 = vsel %vm382, %v1228, 0.0
        %v1251 = vadd.f32 %v1249, %v1250
        %v1252 = vrot.slane %v1251, 4
        %v1253 = vadd.f32 %v1251, %v1252
        %v1254 = vrot.slane %v1253, 2
        %v1255 = vadd.f32 %v1253, %v1254
        %v1256 = vrot.slane %v1255, 1
        %v1257 = vadd.f32 %v1255, %v1256
        %v1258 = vsel %vm382, %v1229, 0.0
        %v1259 = vsel %vm382, %v1230, 0.0
        %v1260 = vadd.f32 %v1258, %v1259
        %v1261 = vrot.slane %v1260, 4
        %v1262 = vadd.f32 %v1260, %v1261
        %v1263 = vrot.slane %v1262, 2
        %v1264 = vadd.f32 %v1262, %v1263
        %v1265 = vrot.slane %v1264, 1
        %v1266 = vadd.f32 %v1264, %v1265
        %v1267 = vmul.f32 %v1239, %v419
        %v1268 = vmul.f32 %v1248, %v419
        %v1269 = vmul.f32 %v1257, %v419
        %v1270 = vmul.f32 %v1266, %v419
        %v1271 = vadd.f32 %v1267, 1e-05
        %v1272 = vadd.f32 %v1268, 1e-05
        %v1273 = vadd.f32 %v1269, 1e-05
        %v1274 = vadd.f32 %v1270, 1e-05
        %v1275 = vrsqrt.pop %v1271
        %v1276 = vrsqrt.pop %v1272
        %v1277 = vrsqrt.pop %v1273
        %v1278 = vrsqrt.pop %v1274
        %v1279 = vmul.f32 %v1215, %v1275
        %v1280 = vmul.f32 %v1216, %v1275
        %v1281 = vmul.f32 %v1217, %v1276
        %v1282 = vmul.f32 %v1218, %v1276
        %v1283 = vmul.f32 %v1219, %v1277
        %v1284 = vmul.f32 %v1220, %v1277
        %v1285 = vmul.f32 %v1221, %v1278
        %v1286 = vmul.f32 %v1222, %v1278
        %1288 = vset.pattern.permute.xlu0 0
        %1289 = vperm.xlu0 %1288, %v1171
        %v1290 = vpop.permute.xlu0 %1289
        %1293 = vset.pattern.permute.xlu0 0
        %1294 = vperm.xlu0 %1293, %v1172
        %v1295 = vpop.permute.xlu0 %1294
        %v1297 = vmul.f32 %v1279, %v1290
        %v1298 = vmul.f32 %v1280, %v1295
        %v1299 = vmul.f32 %v1281, %v1290
        %v1300 = vmul.f32 %v1282, %v1295
        %v1301 = vmul.f32 %v1283, %v1290
        %v1302 = vmul.f32 %v1284, %v1295
        %v1303 = vmul.f32 %v1285, %v1290
        %v1304 = vmul.f32 %v1286, %v1295
        %1306 = vset.pattern.permute.xlu0 0
        %1307 = vperm.xlu0 %1306, %v1173
        %v1308 = vpop.permute.xlu0 %1307
        %1311 = vset.pattern.permute.xlu0 0
        %1312 = vperm.xlu0 %1311, %v1174
        %v1313 = vpop.permute.xlu0 %1312
        %v1315 = vadd.f32 %v1297, %v1308
        %v1316 = vadd.f32 %v1298, %v1313
        %v1317 = vadd.f32 %v1299, %v1308
        %v1318 = vadd.f32 %v1300, %v1313
        %v1319 = vadd.f32 %v1301, %v1308
        %v1320 = vadd.f32 %v1302, %v1313
        %v1321 = vadd.f32 %v1303, %v1308
        %v1322 = vadd.f32 %v1304, %v1313
        %v1323 = vmul.f32 %v1315, 0.5
        %v1324 = vmul.f32 %v1316, 0.5
        %v1325 = vmul.f32 %v1317, 0.5
        %v1326 = vmul.f32 %v1318, 0.5
        %v1327 = vmul.f32 %v1319, 0.5
        %v1328 = vmul.f32 %v1320, 0.5
        %v1329 = vmul.f32 %v1321, 0.5
        %v1330 = vmul.f32 %v1322, 0.5
        %v1331 = vmul.f32 %v1315, 0.70710677
        %v1332 = vmul.f32 %v1316, 0.70710677
        %v1333 = vmul.f32 %v1317, 0.70710677
        %v1334 = vmul.f32 %v1318, 0.70710677
        %v1335 = vmul.f32 %v1319, 0.70710677
        %v1336 = vmul.f32 %v1320, 0.70710677
        %v1337 = vmul.f32 %v1321, 0.70710677
        %v1338 = vmul.f32 %v1322, 0.70710677
        %v1339 = verf.f32.pop %v1331
        %v1340 = verf.f32.pop %v1332
        %v1341 = verf.f32.pop %v1333
        %v1342 = verf.f32.pop %v1334
        %v1343 = verf.f32.pop %v1335
        %v1344 = verf.f32.pop %v1336
        %v1345 = verf.f32.pop %v1337
        %v1346 = verf.f32.pop %v1338
        %v1347 = vadd.f32 %v1339, 1.0
        %v1348 = vadd.f32 %v1340, 1.0
        %v1349 = vadd.f32 %v1341, 1.0
        %v1350 = vadd.f32 %v1342, 1.0
        %v1351 = vadd.f32 %v1343, 1.0
        %v1352 = vadd.f32 %v1344, 1.0
        %v1353 = vadd.f32 %v1345, 1.0
        %v1354 = vadd.f32 %v1346, 1.0
        %v1355 = vmul.f32 %v1323, %v1347
        %v1356 = vmul.f32 %v1324, %v1348
        %v1357 = vmul.f32 %v1325, %v1349
        %v1358 = vmul.f32 %v1326, %v1350
        %v1359 = vmul.f32 %v1327, %v1351
        %v1360 = vmul.f32 %v1328, %v1352
        %v1361 = vmul.f32 %v1329, %v1353
        %v1362 = vmul.f32 %v1330, %v1354
        %1363 = vrot.lane.b32.xlu0 %v1355, 16
        %v1364 = vpop.permute.xlu0 %1363
        %v1365 = vsel %vm572, %v1364, %v1355
        %1366 = vrot.lane.b32.xlu0 %v1356, 16
        %v1367 = vpop.permute.xlu0 %1366
        %v1368 = vsel %vm572, %v1367, %v1356
        %1369 = vrot.lane.b32.xlu0 %v1357, 16
        %v1370 = vpop.permute.xlu0 %1369
        %v1371 = vsel %vm572, %v1370, %v1357
        %1372 = vrot.lane.b32.xlu0 %v1358, 16
        %v1373 = vpop.permute.xlu0 %1372
        %v1374 = vsel %vm572, %v1373, %v1358
        %1375 = vrot.lane.b32.xlu0 %v1359, 16
        %v1376 = vpop.permute.xlu0 %1375
        %v1377 = vsel %vm572, %v1376, %v1359
        %1378 = vrot.lane.b32.xlu0 %v1360, 16
        %v1379 = vpop.permute.xlu0 %1378
        %v1380 = vsel %vm572, %v1379, %v1360
        %1381 = vrot.lane.b32.xlu0 %v1361, 16
        %v1382 = vpop.permute.xlu0 %1381
        %v1383 = vsel %vm572, %v1382, %v1361
        %1384 = vrot.lane.b32.xlu0 %v1362, 16
        %v1385 = vpop.permute.xlu0 %1384
        %v1386 = vsel %vm572, %v1385, %v1362
        %1387 = vrot.lane.b32.xlu0 %v1365, 16
        %v1388 = vpop.permute.xlu0 %1387
        %1389 = vrot.lane.b32.xlu0 %v1368, 16
        %v1390 = vpop.permute.xlu0 %1389
        %1391 = vrot.lane.b32.xlu0 %v1371, 16
        %v1392 = vpop.permute.xlu0 %1391
        %1393 = vrot.lane.b32.xlu0 %v1374, 16
        %v1394 = vpop.permute.xlu0 %1393
        %1395 = vrot.lane.b32.xlu0 %v1377, 16
        %v1396 = vpop.permute.xlu0 %1395
        %1397 = vrot.lane.b32.xlu0 %v1380, 16
        %v1398 = vpop.permute.xlu0 %1397
        %1399 = vrot.lane.b32.xlu0 %v1383, 16
        %v1400 = vpop.permute.xlu0 %1399
        %1401 = vrot.lane.b32.xlu0 %v1386, 16
        %v1402 = vpop.permute.xlu0 %1401
        %v1403 = vsel %vm572, %v1388, %v1355
        %v1404 = vsel %vm572, %v1390, %v1356
        %v1405 = vsel %vm572, %v1392, %v1357
        %v1406 = vsel %vm572, %v1394, %v1358
        %v1407 = vsel %vm572, %v1396, %v1359
        %v1408 = vsel %vm572, %v1398, %v1360
        %v1409 = vsel %vm572, %v1400, %v1361
        %v1410 = vsel %vm572, %v1402, %v1362
        %1419 = vrot.lane.b32.xlu0 %v1403, 113
        %v1420 = vpop.permute.xlu0 %1419
        %1421 = vrot.lane.b32.xlu0 %v1404, 113
        %v1422 = vpop.permute.xlu0 %1421
        %1423 = vrot.lane.b32.xlu0 %v1405, 113
        %v1424 = vpop.permute.xlu0 %1423
        %1425 = vrot.lane.b32.xlu0 %v1406, 113
        %v1426 = vpop.permute.xlu0 %1425
        %1427 = vrot.lane.b32.xlu0 %v1407, 113
        %v1428 = vpop.permute.xlu0 %1427
        %1429 = vrot.lane.b32.xlu0 %v1408, 113
        %v1430 = vpop.permute.xlu0 %1429
        %1431 = vrot.lane.b32.xlu0 %v1409, 113
        %v1432 = vpop.permute.xlu0 %1431
        %1433 = vrot.lane.b32.xlu0 %v1410, 113
        %v1434 = vpop.permute.xlu0 %1433
        %v1443 = vsel %vm376, %v1420, 0.0
        %v1444 = vsel %vm376, %v1422, 0.0
        %v1445 = vsel %vm376, %v1424, 0.0
        %v1446 = vsel %vm376, %v1426, 0.0
        %v1447 = vsel %vm376, %v1428, 0.0
        %v1448 = vsel %vm376, %v1430, 0.0
        %v1449 = vsel %vm376, %v1432, 0.0
        %v1450 = vsel %vm376, %v1434, 0.0
        %v1451 = vld [vmem:[#allocation5] sm:$0xff]
        %v1452 = vld [vmem:[#allocation5 + $0x8] sm:$0xff]
        %v1453 = vld [vmem:[#allocation5 + $0x10] sm:$0xff]
        %v1454 = vld [vmem:[#allocation5 + $0x18] sm:$0xff]
        %v1455 = vld [vmem:[#allocation5 + $0x20] sm:$0xff]
        %v1456 = vld [vmem:[#allocation5 + $0x28] sm:$0xff]
        %v1457 = vld [vmem:[#allocation5 + $0x30] sm:$0xff]
        %v1458 = vld [vmem:[#allocation5 + $0x38] sm:$0xff]
        %s1459 = scalar_lea.vmem [#allocation5], 64
        %v1460 = vld [vmem:[%s1459] sm:$0xff]
        %v1461 = vld [vmem:[%s1459 + $0x8] sm:$0xff]
        %v1462 = vld [vmem:[%s1459 + $0x10] sm:$0xff]
        %v1463 = vld [vmem:[%s1459 + $0x18] sm:$0xff]
        %v1464 = vld [vmem:[%s1459 + $0x20] sm:$0xff]
        %v1465 = vld [vmem:[%s1459 + $0x28] sm:$0xff]
        %v1466 = vld [vmem:[%s1459 + $0x30] sm:$0xff]
        %v1467 = vld [vmem:[%s1459 + $0x38] sm:$0xff]
        %v1469 = vsel %vm678, %v1460, 0
        %v1472 = vsel %vm678, %v1461, 0
        %v1475 = vsel %vm678, %v1462, 0
        %v1478 = vsel %vm678, %v1463, 0
        %v1481 = vsel %vm678, %v1464, 0
        %v1484 = vsel %vm678, %v1465, 0
        %v1487 = vsel %vm678, %v1466, 0
        %v1490 = vsel %vm678, %v1467, 0
        %1492 = vmatprep.subr.mxu0 0.0
        %1493 = vmatpush1.msra.mxu0 0.0
        %1494 = vmatprep.subr.mxu0 0.0
        %1495 = vmatpush1.msra.mxu0 0.0
        %1496 = vmatprep.subr.mxu0 0.0
        %1497 = vmatpush1.msra.mxu0 0.0
        %1498 = vmatprep.subr.mxu0 0.0
        %1499 = vmatpush1.msra.mxu0 0.0
        %1500 = vmatprep.subr.mxu0 0.0
        %1501 = vmatpush1.msra.mxu0 0.0
        %1502 = vmatprep.subr.mxu0 0.0
        %1503 = vmatpush1.msra.mxu0 0.0
        %1504 = vmatprep.subr.mxu0 0.0
        %1505 = vmatpush1.msra.mxu0 0.0
        %1506 = vmatprep.subr.mxu0 0.0
        %1507 = vmatpush1.msra.mxu0 0.0
        %1508 = vmatprep.subr.mxu0 0.0
        %1509 = vmatpush1.msra.mxu0 %v1362
        %1510 = vmatprep.subr.mxu0 0.0
        %1511 = vmatpush1.msra.mxu0 %v1361
        %1512 = vmatprep.subr.mxu0 0.0
        %1513 = vmatpush1.msra.mxu0 %v1360
        %1514 = vmatprep.subr.mxu0 0.0
        %1515 = vmatpush1.msra.mxu0 %v1359
        %1516 = vmatprep.subr.mxu0 0.0
        %1517 = vmatpush1.msra.mxu0 %v1358
        %1518 = vmatprep.subr.mxu0 0.0
        %1519 = vmatpush1.msra.mxu0 %v1357
        %1520 = vmatprep.subr.mxu0 0.0
        %1521 = vmatpush1.msra.mxu0 %v1356
        %1522 = vmatprep.subr.mxu0 0.0
        %1523 = vmatpush1.msra.mxu0 %v1355
        %1524 = vmatprep.subr.mxu0 0.0
        %1525 = vmatpush2.msra.mxu0 0.0
        %1526 = vmatprep.subr.mxu0 0.0
        %1527 = vmatpush2.msra.mxu0 0.0
        %1528 = vmatprep.subr.mxu0 0.0
        %1529 = vmatpush2.msra.mxu0 0.0
        %1530 = vmatprep.subr.mxu0 0.0
        %1531 = vmatpush2.msra.mxu0 0.0
        %1532 = vmatprep.subr.mxu0 0.0
        %1533 = vmatpush2.msra.mxu0 0.0
        %1534 = vmatprep.subr.mxu0 0.0
        %1535 = vmatpush2.msra.mxu0 0.0
        %1536 = vmatprep.subr.mxu0 0.0
        %1537 = vmatpush2.msra.mxu0 0.0
        %1538 = vmatprep.subr.mxu0 0.0
        %1539 = vmatpush2.msra.mxu0 0.0
        %1540 = vmatprep.subr.mxu0 0.0
        %1541 = vmatpush2.msra.mxu0 0.0
        %1542 = vmatprep.subr.mxu0 0.0
        %1543 = vmatpush2.msra.mxu0 0.0
        %1544 = vmatprep.subr.mxu0 0.0
        %1545 = vmatpush2.msra.mxu0 0.0
        %1546 = vmatprep.subr.mxu0 0.0
        %1547 = vmatpush2.msra.mxu0 0.0
        %1548 = vmatprep.subr.mxu0 0.0
        %1549 = vmatpush2.msra.mxu0 0.0
        %1550 = vmatprep.subr.mxu0 0.0
        %1551 = vmatpush2.msra.mxu0 0.0
        %1552 = vmatprep.subr.mxu0 0.0
        %1553 = vmatpush2.msra.mxu0 0.0
        %1554 = vmatprep.subr.mxu0 0.0
        %1555 = vmatpush2.msra.mxu0 0.0
        %1556 = vmatprep.mubr.f32.mxu0 0.0
        %1557 = vmatmul.mubr.f32.gmra.mxu0 %v1469
        %v1558 = vpop.f32.mrf.mxu0
        %v1559 = vadd.f32 0.0, %v1558
        %v1560 = vpop.f32.mrf.mxu0
        %1561 = vmatprep.mubr.f32.mxu0 0.0
        %1562 = vmatmul.mubr.f32.gmra.mxu0 %v1472
        %v1563 = vpop.f32.mrf.mxu0
        %v1564 = vadd.f32 0.0, %v1563
        %v1565 = vpop.f32.mrf.mxu0
        %1566 = vmatprep.mubr.f32.mxu0 0.0
        %1567 = vmatmul.mubr.f32.gmra.mxu0 %v1475
        %v1568 = vpop.f32.mrf.mxu0
        %v1569 = vadd.f32 0.0, %v1568
        %v1570 = vpop.f32.mrf.mxu0
        %1571 = vmatprep.mubr.f32.mxu0 0.0
        %1572 = vmatmul.mubr.f32.gmra.mxu0 %v1478
        %v1573 = vpop.f32.mrf.mxu0
        %v1574 = vadd.f32 0.0, %v1573
        %v1575 = vpop.f32.mrf.mxu0
        %1576 = vmatprep.mubr.f32.mxu0 0.0
        %1577 = vmatmul.mubr.f32.gmra.mxu0 %v1481
        %v1578 = vpop.f32.mrf.mxu0
        %v1579 = vadd.f32 0.0, %v1578
        %v1580 = vpop.f32.mrf.mxu0
        %1581 = vmatprep.mubr.f32.mxu0 0.0
        %1582 = vmatmul.mubr.f32.gmra.mxu0 %v1484
        %v1583 = vpop.f32.mrf.mxu0
        %v1584 = vadd.f32 0.0, %v1583
        %v1585 = vpop.f32.mrf.mxu0
        %1586 = vmatprep.mubr.f32.mxu0 0.0
        %1587 = vmatmul.mubr.f32.gmra.mxu0 %v1487
        %v1588 = vpop.f32.mrf.mxu0
        %v1589 = vadd.f32 0.0, %v1588
        %v1590 = vpop.f32.mrf.mxu0
        %1591 = vmatprep.mubr.f32.mxu0 0.0
        %1592 = vmatmul.mubr.f32.gmra.mxu0 %v1490
        %v1593 = vpop.f32.mrf.mxu0
        %v1594 = vadd.f32 0.0, %v1593
        %v1595 = vpop.f32.mrf.mxu0
        %1596 = vdwg.mxu0
        %v1598 = vsel %vm678, %v1451, 0
        %v1601 = vsel %vm678, %v1452, 0
        %v1604 = vsel %vm678, %v1453, 0
        %v1607 = vsel %vm678, %v1454, 0
        %v1610 = vsel %vm678, %v1455, 0
        %v1613 = vsel %vm678, %v1456, 0
        %v1616 = vsel %vm678, %v1457, 0
        %v1619 = vsel %vm678, %v1458, 0
        %1621 = vmatprep.subr.mxu0 0.0
        %1622 = vmatpush1.msra.mxu0 0.0
        %1623 = vmatprep.subr.mxu0 0.0
        %1624 = vmatpush1.msra.mxu0 0.0
        %1625 = vmatprep.subr.mxu0 0.0
        %1626 = vmatpush1.msra.mxu0 0.0
        %1627 = vmatprep.subr.mxu0 0.0
        %1628 = vmatpush1.msra.mxu0 0.0
        %1629 = vmatprep.subr.mxu0 0.0
        %1630 = vmatpush1.msra.mxu0 0.0
        %1631 = vmatprep.subr.mxu0 0.0
        %1632 = vmatpush1.msra.mxu0 0.0
        %1633 = vmatprep.subr.mxu0 0.0
        %1634 = vmatpush1.msra.mxu0 0.0
        %1635 = vmatprep.subr.mxu0 0.0
        %1636 = vmatpush1.msra.mxu0 0.0
        %1637 = vmatprep.subr.mxu0 0.0
        %1638 = vmatpush1.msra.mxu0 %v1450
        %1639 = vmatprep.subr.mxu0 0.0
        %1640 = vmatpush1.msra.mxu0 %v1449
        %1641 = vmatprep.subr.mxu0 0.0
        %1642 = vmatpush1.msra.mxu0 %v1448
        %1643 = vmatprep.subr.mxu0 0.0
        %1644 = vmatpush1.msra.mxu0 %v1447
        %1645 = vmatprep.subr.mxu0 0.0
        %1646 = vmatpush1.msra.mxu0 %v1446
        %1647 = vmatprep.subr.mxu0 0.0
        %1648 = vmatpush1.msra.mxu0 %v1445
        %1649 = vmatprep.subr.mxu0 0.0
        %1650 = vmatpush1.msra.mxu0 %v1444
        %1651 = vmatprep.subr.mxu0 0.0
        %1652 = vmatpush1.msra.mxu0 %v1443
        %1653 = vmatprep.subr.mxu0 0.0
        %1654 = vmatpush2.msra.mxu0 0.0
        %1655 = vmatprep.subr.mxu0 0.0
        %1656 = vmatpush2.msra.mxu0 0.0
        %1657 = vmatprep.subr.mxu0 0.0
        %1658 = vmatpush2.msra.mxu0 0.0
        %1659 = vmatprep.subr.mxu0 0.0
        %1660 = vmatpush2.msra.mxu0 0.0
        %1661 = vmatprep.subr.mxu0 0.0
        %1662 = vmatpush2.msra.mxu0 0.0
        %1663 = vmatprep.subr.mxu0 0.0
        %1664 = vmatpush2.msra.mxu0 0.0
        %1665 = vmatprep.subr.mxu0 0.0
        %1666 = vmatpush2.msra.mxu0 0.0
        %1667 = vmatprep.subr.mxu0 0.0
        %1668 = vmatpush2.msra.mxu0 0.0
        %1669 = vmatprep.subr.mxu0 0.0
        %1670 = vmatpush2.msra.mxu0 0.0
        %1671 = vmatprep.subr.mxu0 0.0
        %1672 = vmatpush2.msra.mxu0 0.0
        %1673 = vmatprep.subr.mxu0 0.0
        %1674 = vmatpush2.msra.mxu0 0.0
        %1675 = vmatprep.subr.mxu0 0.0
        %1676 = vmatpush2.msra.mxu0 0.0
        %1677 = vmatprep.subr.mxu0 0.0
        %1678 = vmatpush2.msra.mxu0 0.0
        %1679 = vmatprep.subr.mxu0 0.0
        %1680 = vmatpush2.msra.mxu0 0.0
        %1681 = vmatprep.subr.mxu0 0.0
        %1682 = vmatpush2.msra.mxu0 0.0
        %1683 = vmatprep.subr.mxu0 0.0
        %1684 = vmatpush2.msra.mxu0 0.0
        %1685 = vmatprep.mubr.f32.mxu0 0.0
        %1686 = vmatmul.mubr.f32.gmra.mxu0 %v1598
        %v1687 = vpop.f32.mrf.mxu0
        %v1688 = vadd.f32 %v1559, %v1687
        %v1689 = vpop.f32.mrf.mxu0
        %1690 = vmatprep.mubr.f32.mxu0 0.0
        %1691 = vmatmul.mubr.f32.gmra.mxu0 %v1601
        %v1692 = vpop.f32.mrf.mxu0
        %v1693 = vadd.f32 %v1564, %v1692
        %v1694 = vpop.f32.mrf.mxu0
        %1695 = vmatprep.mubr.f32.mxu0 0.0
        %1696 = vmatmul.mubr.f32.gmra.mxu0 %v1604
        %v1697 = vpop.f32.mrf.mxu0
        %v1698 = vadd.f32 %v1569, %v1697
        %v1699 = vpop.f32.mrf.mxu0
        %1700 = vmatprep.mubr.f32.mxu0 0.0
        %1701 = vmatmul.mubr.f32.gmra.mxu0 %v1607
        %v1702 = vpop.f32.mrf.mxu0
        %v1703 = vadd.f32 %v1574, %v1702
        %v1704 = vpop.f32.mrf.mxu0
        %1705 = vmatprep.mubr.f32.mxu0 0.0
        %1706 = vmatmul.mubr.f32.gmra.mxu0 %v1610
        %v1707 = vpop.f32.mrf.mxu0
        %v1708 = vadd.f32 %v1579, %v1707
        %v1709 = vpop.f32.mrf.mxu0
        %1710 = vmatprep.mubr.f32.mxu0 0.0
        %1711 = vmatmul.mubr.f32.gmra.mxu0 %v1613
        %v1712 = vpop.f32.mrf.mxu0
        %v1713 = vadd.f32 %v1584, %v1712
        %v1714 = vpop.f32.mrf.mxu0
        %1715 = vmatprep.mubr.f32.mxu0 0.0
        %1716 = vmatmul.mubr.f32.gmra.mxu0 %v1616
        %v1717 = vpop.f32.mrf.mxu0
        %v1718 = vadd.f32 %v1589, %v1717
        %v1719 = vpop.f32.mrf.mxu0
        %1720 = vmatprep.mubr.f32.mxu0 0.0
        %1721 = vmatmul.mubr.f32.gmra.mxu0 %v1619
        %v1722 = vpop.f32.mrf.mxu0
        %v1723 = vadd.f32 %v1594, %v1722
        %v1724 = vpop.f32.mrf.mxu0
        %1725 = vdwg.mxu0
        %1726 = vrot.lane.b32.xlu0 %v1403, 127
        %v1727 = vpop.permute.xlu0 %1726
        %1728 = vrot.lane.b32.xlu0 %v1404, 127
        %v1729 = vpop.permute.xlu0 %1728
        %1730 = vrot.lane.b32.xlu0 %v1405, 127
        %v1731 = vpop.permute.xlu0 %1730
        %1732 = vrot.lane.b32.xlu0 %v1406, 127
        %v1733 = vpop.permute.xlu0 %1732
        %1734 = vrot.lane.b32.xlu0 %v1407, 127
        %v1735 = vpop.permute.xlu0 %1734
        %1736 = vrot.lane.b32.xlu0 %v1408, 127
        %v1737 = vpop.permute.xlu0 %1736
        %1738 = vrot.lane.b32.xlu0 %v1409, 127
        %v1739 = vpop.permute.xlu0 %1738
        %1740 = vrot.lane.b32.xlu0 %v1410, 127
        %v1741 = vpop.permute.xlu0 %1740
        %v1750 = vsel %vm377, %v1727, 0.0
        %v1751 = vsel %vm377, %v1729, 0.0
        %v1752 = vsel %vm377, %v1731, 0.0
        %v1753 = vsel %vm377, %v1733, 0.0
        %v1754 = vsel %vm377, %v1735, 0.0
        %v1755 = vsel %vm377, %v1737, 0.0
        %v1756 = vsel %vm377, %v1739, 0.0
        %v1757 = vsel %vm377, %v1741, 0.0
        %s1758 = scalar_lea.vmem [#allocation5], 128
        %v1759 = vld [vmem:[%s1758] sm:$0xff]
        %v1760 = vld [vmem:[%s1758 + $0x8] sm:$0xff]
        %v1761 = vld [vmem:[%s1758 + $0x10] sm:$0xff]
        %v1762 = vld [vmem:[%s1758 + $0x18] sm:$0xff]
        %v1763 = vld [vmem:[%s1758 + $0x20] sm:$0xff]
        %v1764 = vld [vmem:[%s1758 + $0x28] sm:$0xff]
        %v1765 = vld [vmem:[%s1758 + $0x30] sm:$0xff]
        %v1766 = vld [vmem:[%s1758 + $0x38] sm:$0xff]
        %v1768 = vsel %vm678, %v1759, 0
        %v1771 = vsel %vm678, %v1760, 0
        %v1774 = vsel %vm678, %v1761, 0
        %v1777 = vsel %vm678, %v1762, 0
        %v1780 = vsel %vm678, %v1763, 0
        %v1783 = vsel %vm678, %v1764, 0
        %v1786 = vsel %vm678, %v1765, 0
        %v1789 = vsel %vm678, %v1766, 0
        %1791 = vmatprep.subr.mxu0 0.0
        %1792 = vmatpush1.msra.mxu0 0.0
        %1793 = vmatprep.subr.mxu0 0.0
        %1794 = vmatpush1.msra.mxu0 0.0
        %1795 = vmatprep.subr.mxu0 0.0
        %1796 = vmatpush1.msra.mxu0 0.0
        %1797 = vmatprep.subr.mxu0 0.0
        %1798 = vmatpush1.msra.mxu0 0.0
        %1799 = vmatprep.subr.mxu0 0.0
        %1800 = vmatpush1.msra.mxu0 0.0
        %1801 = vmatprep.subr.mxu0 0.0
        %1802 = vmatpush1.msra.mxu0 0.0
        %1803 = vmatprep.subr.mxu0 0.0
        %1804 = vmatpush1.msra.mxu0 0.0
        %1805 = vmatprep.subr.mxu0 0.0
        %1806 = vmatpush1.msra.mxu0 0.0
        %1807 = vmatprep.subr.mxu0 0.0
        %1808 = vmatpush1.msra.mxu0 %v1757
        %1809 = vmatprep.subr.mxu0 0.0
        %1810 = vmatpush1.msra.mxu0 %v1756
        %1811 = vmatprep.subr.mxu0 0.0
        %1812 = vmatpush1.msra.mxu0 %v1755
        %1813 = vmatprep.subr.mxu0 0.0
        %1814 = vmatpush1.msra.mxu0 %v1754
        %1815 = vmatprep.subr.mxu0 0.0
        %1816 = vmatpush1.msra.mxu0 %v1753
        %1817 = vmatprep.subr.mxu0 0.0
        %1818 = vmatpush1.msra.mxu0 %v1752
        %1819 = vmatprep.subr.mxu0 0.0
        %1820 = vmatpush1.msra.mxu0 %v1751
        %1821 = vmatprep.subr.mxu0 0.0
        %1822 = vmatpush1.msra.mxu0 %v1750
        %1823 = vmatprep.subr.mxu0 0.0
        %1824 = vmatpush2.msra.mxu0 0.0
        %1825 = vmatprep.subr.mxu0 0.0
        %1826 = vmatpush2.msra.mxu0 0.0
        %1827 = vmatprep.subr.mxu0 0.0
        %1828 = vmatpush2.msra.mxu0 0.0
        %1829 = vmatprep.subr.mxu0 0.0
        %1830 = vmatpush2.msra.mxu0 0.0
        %1831 = vmatprep.subr.mxu0 0.0
        %1832 = vmatpush2.msra.mxu0 0.0
        %1833 = vmatprep.subr.mxu0 0.0
        %1834 = vmatpush2.msra.mxu0 0.0
        %1835 = vmatprep.subr.mxu0 0.0
        %1836 = vmatpush2.msra.mxu0 0.0
        %1837 = vmatprep.subr.mxu0 0.0
        %1838 = vmatpush2.msra.mxu0 0.0
        %1839 = vmatprep.subr.mxu0 0.0
        %1840 = vmatpush2.msra.mxu0 0.0
        %1841 = vmatprep.subr.mxu0 0.0
        %1842 = vmatpush2.msra.mxu0 0.0
        %1843 = vmatprep.subr.mxu0 0.0
        %1844 = vmatpush2.msra.mxu0 0.0
        %1845 = vmatprep.subr.mxu0 0.0
        %1846 = vmatpush2.msra.mxu0 0.0
        %1847 = vmatprep.subr.mxu0 0.0
        %1848 = vmatpush2.msra.mxu0 0.0
        %1849 = vmatprep.subr.mxu0 0.0
        %1850 = vmatpush2.msra.mxu0 0.0
        %1851 = vmatprep.subr.mxu0 0.0
        %1852 = vmatpush2.msra.mxu0 0.0
        %1853 = vmatprep.subr.mxu0 0.0
        %1854 = vmatpush2.msra.mxu0 0.0
        %1855 = vmatprep.mubr.f32.mxu0 0.0
        %1856 = vmatmul.mubr.f32.gmra.mxu0 %v1768
        %v1857 = vpop.f32.mrf.mxu0
        %v1858 = vadd.f32 0.0, %v1857
        %v1859 = vpop.f32.mrf.mxu0
        %1860 = vmatprep.mubr.f32.mxu0 0.0
        %1861 = vmatmul.mubr.f32.gmra.mxu0 %v1771
        %v1862 = vpop.f32.mrf.mxu0
        %v1863 = vadd.f32 0.0, %v1862
        %v1864 = vpop.f32.mrf.mxu0
        %1865 = vmatprep.mubr.f32.mxu0 0.0
        %1866 = vmatmul.mubr.f32.gmra.mxu0 %v1774
        %v1867 = vpop.f32.mrf.mxu0
        %v1868 = vadd.f32 0.0, %v1867
        %v1869 = vpop.f32.mrf.mxu0
        %1870 = vmatprep.mubr.f32.mxu0 0.0
        %1871 = vmatmul.mubr.f32.gmra.mxu0 %v1777
        %v1872 = vpop.f32.mrf.mxu0
        %v1873 = vadd.f32 0.0, %v1872
        %v1874 = vpop.f32.mrf.mxu0
        %1875 = vmatprep.mubr.f32.mxu0 0.0
        %1876 = vmatmul.mubr.f32.gmra.mxu0 %v1780
        %v1877 = vpop.f32.mrf.mxu0
        %v1878 = vadd.f32 0.0, %v1877
        %v1879 = vpop.f32.mrf.mxu0
        %1880 = vmatprep.mubr.f32.mxu0 0.0
        %1881 = vmatmul.mubr.f32.gmra.mxu0 %v1783
        %v1882 = vpop.f32.mrf.mxu0
        %v1883 = vadd.f32 0.0, %v1882
        %v1884 = vpop.f32.mrf.mxu0
        %1885 = vmatprep.mubr.f32.mxu0 0.0
        %1886 = vmatmul.mubr.f32.gmra.mxu0 %v1786
        %v1887 = vpop.f32.mrf.mxu0
        %v1888 = vadd.f32 0.0, %v1887
        %v1889 = vpop.f32.mrf.mxu0
        %1890 = vmatprep.mubr.f32.mxu0 0.0
        %1891 = vmatmul.mubr.f32.gmra.mxu0 %v1789
        %v1892 = vpop.f32.mrf.mxu0
        %v1893 = vadd.f32 0.0, %v1892
        %v1894 = vpop.f32.mrf.mxu0
        %1895 = vdwg.mxu0
        %v1896 = vadd.f32 %v1688, %v1858
        %v1897 = vadd.f32 %v1693, %v1863
        %v1898 = vadd.f32 %v1698, %v1868
        %v1899 = vadd.f32 %v1703, %v1873
        %v1900 = vadd.f32 %v1708, %v1878
        %v1901 = vadd.f32 %v1713, %v1883
        %v1902 = vadd.f32 %v1718, %v1888
        %v1903 = vadd.f32 %v1723, %v1893
        %v1904 = vld [vmem:[%s8] sm:$0xff]
        %v1905 = vld [vmem:[%s8 + $0x8] sm:$0xff]
        %v1906 = vld [vmem:[%s8 + $0x10] sm:$0xff]
        %v1907 = vld [vmem:[%s8 + $0x18] sm:$0xff]
        %v1908 = vld [vmem:[%s8 + $0x20] sm:$0xff]
        %v1909 = vld [vmem:[%s8 + $0x28] sm:$0xff]
        %v1910 = vld [vmem:[%s8 + $0x30] sm:$0xff]
        %v1911 = vld [vmem:[%s8 + $0x38] sm:$0xff]
        %1913 = vset.pattern.permute.xlu0 0
        %1914 = vperm.xlu0 %1913, %v1904
        %v1915 = vpop.permute.xlu0 %1914
        %1918 = vset.pattern.permute.xlu0 0
        %1919 = vperm.xlu0 %1918, %v1905
        %v1920 = vpop.permute.xlu0 %1919
        %1923 = vset.pattern.permute.xlu0 0
        %1924 = vperm.xlu0 %1923, %v1906
        %v1925 = vpop.permute.xlu0 %1924
        %1928 = vset.pattern.permute.xlu0 0
        %1929 = vperm.xlu0 %1928, %v1907
        %v1930 = vpop.permute.xlu0 %1929
        %1933 = vset.pattern.permute.xlu0 0
        %1934 = vperm.xlu0 %1933, %v1908
        %v1935 = vpop.permute.xlu0 %1934
        %1938 = vset.pattern.permute.xlu0 0
        %1939 = vperm.xlu0 %1938, %v1909
        %v1940 = vpop.permute.xlu0 %1939
        %1943 = vset.pattern.permute.xlu0 0
        %1944 = vperm.xlu0 %1943, %v1910
        %v1945 = vpop.permute.xlu0 %1944
        %1948 = vset.pattern.permute.xlu0 0
        %1949 = vperm.xlu0 %1948, %v1911
        %v1950 = vpop.permute.xlu0 %1949
        %v1952 = vadd.f32 %v1896, %v1915
        %v1953 = vadd.f32 %v1897, %v1920
        %v1954 = vadd.f32 %v1898, %v1925
        %v1955 = vadd.f32 %v1899, %v1930
        %v1956 = vadd.f32 %v1900, %v1935
        %v1957 = vadd.f32 %v1901, %v1940
        %v1958 = vadd.f32 %v1902, %v1945
        %v1959 = vadd.f32 %v1903, %v1950
        %v1960 = vadd.f32 %v1952, %v366
        %v1961 = vadd.f32 %v1953, %v367
        %v1962 = vadd.f32 %v1954, %v368
        %v1963 = vadd.f32 %v1955, %v369
        %v1964 = vadd.f32 %v1956, %v370
        %v1965 = vadd.f32 %v1957, %v371
        %v1966 = vadd.f32 %v1958, %v372
        %v1967 = vadd.f32 %v1959, %v373
        %1968 = vst.msk [vmem:[%s365] sm:$0xff] %vm382, %v1960
        %1969 = vst.msk [vmem:[%s365 + $0x8] sm:$0xff] %vm382, %v1961
        %1970 = vst.msk [vmem:[%s365 + $0x10] sm:$0xff] %vm382, %v1962
        %1971 = vst.msk [vmem:[%s365 + $0x18] sm:$0xff] %vm382, %v1963
        %1972 = vst.msk [vmem:[%s365 + $0x20] sm:$0xff] %vm382, %v1964
        %1973 = vst.msk [vmem:[%s365 + $0x28] sm:$0xff] %vm382, %v1965
        %1974 = vst.msk [vmem:[%s365 + $0x30] sm:$0xff] %vm382, %v1966
        %1975 = vst.msk [vmem:[%s365 + $0x38] sm:$0xff] %vm382, %v1967
        %s1976 = sand.u32 %s229, 1
        %s1977 = scalar_lea.sflag [#allocation4], %s1976
        %s1978 = sand.u32 %s229, 1
        %s1979 = smul.addr %s1978, 64
        %s1980 = scalar_lea.vmem [#allocation7], %s1979
        // Predicated region
        $region65: #{tpu_custom_call.1} parent=55 // pred_check
          %p1981 = pneg %p239
        $region66: #{tpu_custom_call.1} parent=55 // pred_check_branch
          %1983 = sbr.rel (%p1981) target = $region68
        $region67: #{tpu_custom_call.1} parent=55 // pred_region
          %s1985 = ssub.s32 1024, 1024
          %1986 = vsyncadd %s1977, %s1985
          %s1987 = smul.addr %s27, 8
          %s1988 = smul.addr %s1987, 128
          %s1989 = scalar_lea.hbm %s9, %s1988
          %s1990 = sshll.u32 %s1980, 4
          %s1991 = int_to_ptr.vmem [resolvable:$true] %s1990
          %1996 = dma.vmem_to_hbm [thread:$0]  %s1991, 1024, %s1989, %s1977, 128, 128, 8
        $region68: #{tpu_custom_call.1} parent=55 // pred_fallthru
          _
      $region56: #{tpu_custom_call.1} parent=5 // pred_fallthru
        _
      %p1997 = scmp.le.s32.totalorder 2, %s22
      // Predicated region
      $region69: #{tpu_custom_call.1} parent=5 // pred_check
        %p1998 = pneg %p1997
      $region70: #{tpu_custom_call.1} parent=5 // pred_check_branch
        %2000 = sbr.rel (%p1998) target = $region72
      $region71: #{tpu_custom_call.1} parent=5 // pred_region
        %s2001 = ssub.s32 %s22, 2
        // Predicated region
        $region73: #{tpu_custom_call.1} parent=71 // pred_check
          %p2002 = pneg %p245
        $region74: #{tpu_custom_call.1} parent=71 // pred_check_branch
          %2004 = sbr.rel (%p2002) target = $region76
        $region75: #{tpu_custom_call.1} parent=71 // pred_region
          %s2005 = sand.u32 %s230, 1
          %s2006 = scalar_lea.sflag [#allocation4], %s2005
          %s2007 = sand.u32 %s230, 1
          %s2008 = smul.addr %s2007, 64
          %s2009 = scalar_lea.vmem [#allocation7], %s2008
          %2010 = dma.done %s2006, 1024
        $region76: #{tpu_custom_call.1} parent=71 // pred_fallthru
          _
      $region72: #{tpu_custom_call.1} parent=5 // pred_fallthru
        _
    $region6: #{tpu_custom_call.1} parent=1 // loop_footer
      %s26 = sadd.s32 1, %s22
    $region7: #{tpu_custom_call.1} parent=1 // loop_footer_branch
      %21 = sbr.rel target = $region3
    $region8: #{tpu_custom_call.1} parent=1 // loop_exit
      _
    %2011 = vsyncpa [#allocation3], 1
    %s2012 = scalar_lea.sflag [#allocation3], 1
    %2013 = vsyncpa %s2012, 1
    %2014 = vsyncpa [#allocation6], 1
    %2015 = vsyncpa [#allocation4], 1
    %s2016 = scalar_lea.sflag [#allocation4], 1
    %2017 = vsyncpa %s2016, 1

</llo_original>
